<compile_context>
chip_gen: v5e
topology: v5e:2x2
jax: 0.10.0
libtpu: 0.0.40
codegen_flags: <defaults>
</compile_context>

<pallas_src>
import jax
import jax.numpy as jnp
from jax.experimental import pallas as pl
from jax.experimental.pallas import tpu as pltpu

# ----------------------------- model dimensions (tiny) -----------------------------
BATCH = 2
CIN, H, W = 4, 16, 16            # input NCHW [N, 4, 16, 16]
CE, OH, OW = 8, 8, 8             # encoder conv output channels / spatial (stride 2)
ZDIM = 32                        # latent size
CD = 8                           # decoder pre-conv channels (view (N, 8, 8, 8))
COUT = 4                         # reconstructed channels
SENC = OH * OW                   # 64
SDEC = H * W                     # 256


# ----------------------------------- fused kernel ----------------------------------
def _fused_vae_kernel(x_ref, mask_ref, w_enc_ref, b_enc_ref,
                      w_head_ref, b_head_ref, eps_ref,
                      w_up_ref, b_up_ref, w_dec_ref, b_dec_ref,
                      xrec_ref, musig_ref):
    f32 = jnp.float32
    n = eps_ref.shape[0]
    masks = mask_ref[...]                               # [9, 256] precomputed boundary masks

    def conv_taps(feat):
        # 3x3 / pad-1 im2col via lane rolls + precomputed masks; rolls stay inside each
        # row (one (sample, channel) plane per row) so there is no cross-sample leakage.
        pieces = []
        for kh in range(3):
            for kw in range(3):
                tap = kh * 3 + kw
                shift = (-((kh - 1) * W + (kw - 1))) % SDEC
                if shift == 0:
                    pieces.append(feat)                 # center tap, mask == 1 everywhere
                else:
                    pieces.append(pltpu.roll(feat, shift, 1) * masks[tap:tap + 1, :])
        return jnp.concatenate(pieces, axis=0)          # [9*rows, 256]

    # --- encoder conv: one GEMM (computed stride-1; stride-2 sampling folded into head)
    enc = jnp.dot(w_enc_ref[...], conv_taps(x_ref[...]), preferred_element_type=f32)
    enc = jnp.maximum(enc + b_enc_ref[...], 0.0)        # [CE*n, 256], rows (co, n)

    # --- per-sample feature flatten: lane-concat the per-channel row blocks (256-aligned)
    encf = jnp.concatenate([enc[co * n:(co + 1) * n, :] for co in range(CE)],
                           axis=1)                      # [n, CE*256] = [n, 2048]

    # --- fused mu|logvar head: one K=2048 GEMM for the whole batch ----------------------
    musig = jnp.dot(encf, w_head_ref[...], preferred_element_type=f32) + b_head_ref[...]
    mu = musig[:, :ZDIM]                                # [n, 32]
    sig_full = jnp.exp(0.5 * musig)                     # EUP; only lanes >= ZDIM are used
    sigma = sig_full[:, ZDIM:]                          # [n, 32]
    z = mu + sigma * eps_ref[...]                       # reparameterization
    lane = jax.lax.broadcasted_iota(jnp.int32, musig.shape, 1)
    musig_ref[...] = jnp.where(lane < ZDIM, musig, sig_full)   # single [n, 64] store

    # --- decoder FC with nearest-2x upsample folded into the weights: one GEMM ----------
    d = jnp.dot(z, w_up_ref[...], preferred_element_type=f32) + b_up_ref[...]
    d = jnp.maximum(d, 0.0)                             # [n, 2048], cols (c2, h, w)

    # --- lanes -> rows for the conv GEMM: [n, 2048] -> [CD*n, 256], rows (c2, n) --------
    dsp = jnp.concatenate([d[:, c2 * SDEC:(c2 + 1) * SDEC] for c2 in range(CD)], axis=0)

    # --- decoder conv + sigmoid: one GEMM, one lane-dense full [N*COUT, 256] store ------
    y = jnp.dot(w_dec_ref[...], conv_taps(dsp), preferred_element_type=f32) + b_dec_ref[...]
    xrec_ref[...] = 0.5 * (jnp.tanh(0.5 * y) + 1.0)     # stable sigmoid on the EUP


# ------------------------ one-time weight packing (outside jit) ---------------------
def pack_params(p, batch):
    """Repack PyTorch-layout weights into the GEMM forms the kernel consumes.

    The two conv weights are expanded into block-diagonal-over-batch GEMM matrices
    (tiny: [CE*N,72] and [N*COUT,144]), the stride-2 downsample is folded into the
    mu/logvar head weights, and the nearest-2x upsample is folded into the decoder-FC
    weights.  Boundary masks for the 3x3 taps are precomputed here.
    """
    f32 = jnp.float32
    n = batch
    eye_n = jnp.eye(n, dtype=f32)

    # 9 boundary masks for a 16x16 map with 3x3 / pad-1 taps
    hh, ww = jnp.meshgrid(jnp.arange(H), jnp.arange(W), indexing="ij")
    mlist = []
    for kh in range(3):
        for kw in range(3):
            dh, dw = kh - 1, kw - 1
            m = ((hh + dh >= 0) & (hh + dh < H) & (ww + dw >= 0) & (ww + dw < W))
            mlist.append(m.reshape(-1))
    masks = jnp.stack(mlist, 0).astype(f32)                                   # [9, 256]

    # encoder conv -> block-diag GEMM weight: rows (co, n), cols (tap, n, ci)
    w_tap = p["enc_conv_w"].astype(f32).transpose(2, 3, 0, 1).reshape(9, CE, CIN)
    w_enc = jnp.einsum("toc,nm->ontmc", w_tap, eye_n).reshape(CE * n, 9 * n * CIN)
    b_enc = jnp.tile(p["enc_conv_b"].astype(f32).reshape(CE, 1), (1, n)).reshape(CE * n, 1)

    # fused mu|logvar head with the stride-2 selection folded in: [CE*H*W, 64]
    w_head = jnp.concatenate([p["fc_mu_w"], p["fc_lv_w"]], axis=1).astype(f32)  # [512, 64]
    w_head = w_head.reshape(CE, OH, OW, 2 * ZDIM)
    w_head_sel = jnp.zeros((CE, H, W, 2 * ZDIM), f32).at[:, ::2, ::2, :].set(w_head)
    w_head_sel = w_head_sel.reshape(CE * H * W, 2 * ZDIM)                      # [2048, 64]
    b_head = jnp.concatenate([p["fc_mu_b"], p["fc_lv_b"]]).astype(f32).reshape(1, 2 * ZDIM)

    # decoder FC with the nearest-2x upsample folded into the weights: [32, CD*H*W]
    wfc = p["dec_fc_w"].astype(f32).reshape(ZDIM, CD, OH, OW)
    w_up = jnp.repeat(jnp.repeat(wfc, 2, axis=2), 2, axis=3).reshape(ZDIM, CD * H * W)
    bfc = p["dec_fc_b"].astype(f32).reshape(CD, OH, OW)
    b_up = jnp.repeat(jnp.repeat(bfc, 2, axis=1), 2, axis=2).reshape(1, CD * H * W)

    # decoder conv -> block-diag GEMM weight: rows (n, co), cols (tap, c2, n)
    wd_tap = p["dec_conv_w"].astype(f32).transpose(2, 3, 0, 1).reshape(9, COUT, CD)
    w_dec = jnp.einsum("toc,nm->notcm", wd_tap, eye_n).reshape(n * COUT, 9 * CD * n)
    b_dec = jnp.tile(p["dec_conv_b"].astype(f32).reshape(1, COUT), (n, 1)).reshape(n * COUT, 1)

    return dict(masks=masks, w_enc=w_enc, b_enc=b_enc,
                w_head=w_head_sel, b_head=b_head,
                w_up=w_up, b_up=b_up, w_dec=w_dec, b_dec=b_dec)


# ------------------------------- jitted forward -------------------------------------
@jax.jit
def autoencoder_forward(x_nchw, packed, eps):
    nb = x_nchw.shape[0]
    x_flat = x_nchw.reshape(nb * CIN, H * W)            # metadata-only reshape (no launch)

    xrec_flat, musig = pl.pallas_call(
        _fused_vae_kernel,
        out_shape=(jax.ShapeDtypeStruct((nb * COUT, SDEC), jnp.float32),
                   jax.ShapeDtypeStruct((nb, 2 * ZDIM), jnp.float32)),
    )(x_flat, packed["masks"], packed["w_enc"], packed["b_enc"],
      packed["w_head"], packed["b_head"], eps,
      packed["w_up"], packed["b_up"], packed["w_dec"], packed["b_dec"])

    x_rec = xrec_flat.reshape(nb, COUT, H, W)           # metadata-only reshape
    return x_rec, musig[:, :ZDIM], musig[:, ZDIM:]


# ------------------------- pure-JAX reference (for checking) ------------------------
def reference_forward(x, p, eps):
    h = jax.lax.conv_general_dilated(
        x, p["enc_conv_w"], window_strides=(2, 2), padding=((1, 1), (1, 1)),
        dimension_numbers=("NCHW", "OIHW", "NCHW"))
    h = jnp.maximum(h + p["enc_conv_b"].reshape(1, -1, 1, 1), 0.0)
    hf = h.reshape(h.shape[0], -1)
    mu = hf @ p["fc_mu_w"] + p["fc_mu_b"]
    logvar = hf @ p["fc_lv_w"] + p["fc_lv_b"]
    sigma = jnp.exp(0.5 * logvar)
    z = mu + sigma * eps
    d = jnp.maximum(z @ p["dec_fc_w"] + p["dec_fc_b"], 0.0).reshape(-1, CD, OH, OW)
    d = jnp.repeat(jnp.repeat(d, 2, axis=2), 2, axis=3)
    y = jax.lax.conv_general_dilated(
        d, p["dec_conv_w"], window_strides=(1, 1), padding=((1, 1), (1, 1)),
        dimension_numbers=("NCHW", "OIHW", "NCHW"))
    y = jax.nn.sigmoid(y + p["dec_conv_b"].reshape(1, -1, 1, 1))
    return y, mu, sigma


# --------------------------- deterministic parameters --------------------------------
def make_params(key):
    ks = jax.random.split(key, 10)
    s = 0.05
    return {
        "enc_conv_w": s * jax.random.normal(ks[0], (CE, CIN, 3, 3), jnp.float32),
        "enc_conv_b": s * jax.random.normal(ks[1], (CE,), jnp.float32),
        "fc_mu_w":    s * jax.random.normal(ks[2], (CE * SENC, ZDIM), jnp.float32),
        "fc_mu_b":    s * jax.random.normal(ks[3], (ZDIM,), jnp.float32),
        "fc_lv_w":    s * jax.random.normal(ks[4], (CE * SENC, ZDIM), jnp.float32),
        "fc_lv_b":    s * jax.random.normal(ks[5], (ZDIM,), jnp.float32),
        "dec_fc_w":   s * jax.random.normal(ks[6], (ZDIM, CD * SENC), jnp.float32),
        "dec_fc_b":   s * jax.random.normal(ks[7], (CD * SENC,), jnp.float32),
        "dec_conv_w": s * jax.random.normal(ks[8], (COUT, CD, 3, 3), jnp.float32),
        "dec_conv_b": s * jax.random.normal(ks[9], (COUT,), jnp.float32),
    }


if __name__ == "__main__":
    key = jax.random.PRNGKey(0)
    k_x, k_p, k_eps = jax.random.split(key, 3)

    x = jax.random.normal(k_x, (BATCH, CIN, H, W), jnp.float32)     # NCHW input
    params = make_params(k_p)
    packed = pack_params(params, BATCH)                             # batch-specific packing
    eps = jax.random.normal(k_eps, (BATCH, ZDIM), jnp.float32)      # reparam noise

    x_rec, mu, sigma = autoencoder_forward(x, packed, eps)
    jax.block_until_ready((x_rec, mu, sigma))

    assert x_rec.shape == (BATCH, COUT, H, W)
    assert mu.shape == (BATCH, ZDIM) and sigma.shape == (BATCH, ZDIM)

    # numerical check against a plain-JAX reference of the same module
    ref_x, ref_mu, ref_sigma = reference_forward(x, params, eps)
    assert jnp.allclose(x_rec, ref_x, atol=5e-3, rtol=1e-2), "x_rec mismatch"
    assert jnp.allclose(mu, ref_mu, atol=5e-3, rtol=1e-2), "mu mismatch"
    assert jnp.allclose(sigma, ref_sigma, atol=5e-3, rtol=1e-2), "sigma mismatch"

    print("KERNEL_OK")
</pallas_src>

<mosaic_0001>
module attributes {stable_mosaic.version = 11 : i64} {
  func.func @_fused_vae_kernel(%arg0: memref<8x256xf32, #tpu.memory_space<vmem>>, %arg1: memref<9x256xf32, #tpu.memory_space<vmem>>, %arg2: memref<16x72xf32, #tpu.memory_space<vmem>>, %arg3: memref<16x1xf32, #tpu.memory_space<vmem>>, %arg4: memref<2048x64xf32, #tpu.memory_space<vmem>>, %arg5: memref<1x64xf32, #tpu.memory_space<vmem>>, %arg6: memref<2x32xf32, #tpu.memory_space<vmem>>, %arg7: memref<32x2048xf32, #tpu.memory_space<vmem>>, %arg8: memref<1x2048xf32, #tpu.memory_space<vmem>>, %arg9: memref<8x144xf32, #tpu.memory_space<vmem>>, %arg10: memref<8x1xf32, #tpu.memory_space<vmem>>, %arg11: memref<8x256xf32, #tpu.memory_space<vmem>>, %arg12: memref<2x64xf32, #tpu.memory_space<vmem>>) attributes {dimension_semantics = [], scalar_prefetch = 0 : i64, scratch_operands = 0 : i64, tpu.core_type = #tpu.core_type<tc>} {
    %c0 = arith.constant 0 : index
    %c0_0 = arith.constant 0 : index
    %0 = vector.load %arg1[%c0, %c0_0] : memref<9x256xf32, #tpu.memory_space<vmem>>, vector<9x256xf32>
    %c0_1 = arith.constant 0 : index
    %c0_2 = arith.constant 0 : index
    %1 = vector.load %arg2[%c0_1, %c0_2] : memref<16x72xf32, #tpu.memory_space<vmem>>, vector<16x72xf32>
    %c0_3 = arith.constant 0 : index
    %c0_4 = arith.constant 0 : index
    %2 = vector.load %arg0[%c0_3, %c0_4] : memref<8x256xf32, #tpu.memory_space<vmem>>, vector<8x256xf32>
    %c17_i32 = arith.constant 17 : i32
    %3 = tpu.dynamic_rotate %2 by %c17_i32 dim 1 : vector<8x256xf32>, i32 -> vector<8x256xf32>
    %4 = vector.extract_strided_slice %0 {offsets = [0, 0], sizes = [1, 256], strides = [1, 1]} : vector<9x256xf32> to vector<1x256xf32>
    %5 = vector.broadcast %4 : vector<1x256xf32> to vector<8x256xf32>
    %6 = arith.mulf %3, %5 : vector<8x256xf32>
    %c16_i32 = arith.constant 16 : i32
    %7 = tpu.dynamic_rotate %2 by %c16_i32 dim 1 : vector<8x256xf32>, i32 -> vector<8x256xf32>
    %8 = vector.extract_strided_slice %0 {offsets = [1, 0], sizes = [1, 256], strides = [1, 1]} : vector<9x256xf32> to vector<1x256xf32>
    %9 = vector.broadcast %8 : vector<1x256xf32> to vector<8x256xf32>
    %10 = arith.mulf %7, %9 : vector<8x256xf32>
    %c15_i32 = arith.constant 15 : i32
    %11 = tpu.dynamic_rotate %2 by %c15_i32 dim 1 : vector<8x256xf32>, i32 -> vector<8x256xf32>
    %12 = vector.extract_strided_slice %0 {offsets = [2, 0], sizes = [1, 256], strides = [1, 1]} : vector<9x256xf32> to vector<1x256xf32>
    %13 = vector.broadcast %12 : vector<1x256xf32> to vector<8x256xf32>
    %14 = arith.mulf %11, %13 : vector<8x256xf32>
    %c1_i32 = arith.constant 1 : i32
    %15 = tpu.dynamic_rotate %2 by %c1_i32 dim 1 : vector<8x256xf32>, i32 -> vector<8x256xf32>
    %16 = vector.extract_strided_slice %0 {offsets = [3, 0], sizes = [1, 256], strides = [1, 1]} : vector<9x256xf32> to vector<1x256xf32>
    %17 = vector.broadcast %16 : vector<1x256xf32> to vector<8x256xf32>
    %18 = arith.mulf %15, %17 : vector<8x256xf32>
    %c255_i32 = arith.constant 255 : i32
    %19 = tpu.dynamic_rotate %2 by %c255_i32 dim 1 : vector<8x256xf32>, i32 -> vector<8x256xf32>
    %20 = vector.extract_strided_slice %0 {offsets = [5, 0], sizes = [1, 256], strides = [1, 1]} : vector<9x256xf32> to vector<1x256xf32>
    %21 = vector.broadcast %20 : vector<1x256xf32> to vector<8x256xf32>
    %22 = arith.mulf %19, %21 : vector<8x256xf32>
    %c241_i32 = arith.constant 241 : i32
    %23 = tpu.dynamic_rotate %2 by %c241_i32 dim 1 : vector<8x256xf32>, i32 -> vector<8x256xf32>
    %24 = vector.extract_strided_slice %0 {offsets = [6, 0], sizes = [1, 256], strides = [1, 1]} : vector<9x256xf32> to vector<1x256xf32>
    %25 = vector.broadcast %24 : vector<1x256xf32> to vector<8x256xf32>
    %26 = arith.mulf %23, %25 : vector<8x256xf32>
    %c240_i32 = arith.constant 240 : i32
    %27 = tpu.dynamic_rotate %2 by %c240_i32 dim 1 : vector<8x256xf32>, i32 -> vector<8x256xf32>
    %28 = vector.extract_strided_slice %0 {offsets = [7, 0], sizes = [1, 256], strides = [1, 1]} : vector<9x256xf32> to vector<1x256xf32>
    %29 = vector.broadcast %28 : vector<1x256xf32> to vector<8x256xf32>
    %30 = arith.mulf %27, %29 : vector<8x256xf32>
    %c239_i32 = arith.constant 239 : i32
    %31 = tpu.dynamic_rotate %2 by %c239_i32 dim 1 : vector<8x256xf32>, i32 -> vector<8x256xf32>
    %32 = vector.extract_strided_slice %0 {offsets = [8, 0], sizes = [1, 256], strides = [1, 1]} : vector<9x256xf32> to vector<1x256xf32>
    %33 = vector.broadcast %32 : vector<1x256xf32> to vector<8x256xf32>
    %34 = arith.mulf %31, %33 : vector<8x256xf32>
    %35 = tpu.concatenate %6, %10, %14, %18, %2, %22, %26, %30, %34 in 0 : vector<8x256xf32>, vector<8x256xf32>, vector<8x256xf32>, vector<8x256xf32>, vector<8x256xf32>, vector<8x256xf32>, vector<8x256xf32>, vector<8x256xf32>, vector<8x256xf32> -> vector<72x256xf32>
    %cst = arith.constant dense<0.000000e+00> : vector<16x256xf32>
    %36 = tpu.matmul %1, %35, %cst {dimension_numbers = #tpu.dot_dimension_numbers<[1], [0], [0], [1], [0, 0, 1, 1], [], []>} : vector<16x72xf32>, vector<72x256xf32>, vector<16x256xf32> -> vector<16x256xf32>
    %c0_5 = arith.constant 0 : index
    %c0_6 = arith.constant 0 : index
    %37 = vector.load %arg3[%c0_5, %c0_6] : memref<16x1xf32, #tpu.memory_space<vmem>>, vector<16x1xf32>
    %38 = vector.broadcast %37 : vector<16x1xf32> to vector<16x256xf32>
    %39 = arith.addf %36, %38 : vector<16x256xf32>
    %cst_7 = arith.constant 0.000000e+00 : f32
    %40 = vector.broadcast %cst_7 : f32 to vector<16x256xf32>
    %41 = arith.maximumf %39, %40 : vector<16x256xf32>
    %42 = vector.extract_strided_slice %41 {offsets = [0, 0], sizes = [2, 256], strides = [1, 1]} : vector<16x256xf32> to vector<2x256xf32>
    %43 = vector.extract_strided_slice %41 {offsets = [2, 0], sizes = [2, 256], strides = [1, 1]} : vector<16x256xf32> to vector<2x256xf32>
    %44 = vector.extract_strided_slice %41 {offsets = [4, 0], sizes = [2, 256], strides = [1, 1]} : vector<16x256xf32> to vector<2x256xf32>
    %45 = vector.extract_strided_slice %41 {offsets = [6, 0], sizes = [2, 256], strides = [1, 1]} : vector<16x256xf32> to vector<2x256xf32>
    %46 = vector.extract_strided_slice %41 {offsets = [8, 0], sizes = [2, 256], strides = [1, 1]} : vector<16x256xf32> to vector<2x256xf32>
    %47 = vector.extract_strided_slice %41 {offsets = [10, 0], sizes = [2, 256], strides = [1, 1]} : vector<16x256xf32> to vector<2x256xf32>
    %48 = vector.extract_strided_slice %41 {offsets = [12, 0], sizes = [2, 256], strides = [1, 1]} : vector<16x256xf32> to vector<2x256xf32>
    %49 = vector.extract_strided_slice %41 {offsets = [14, 0], sizes = [2, 256], strides = [1, 1]} : vector<16x256xf32> to vector<2x256xf32>
    %50 = tpu.concatenate %42, %43, %44, %45, %46, %47, %48, %49 in 1 : vector<2x256xf32>, vector<2x256xf32>, vector<2x256xf32>, vector<2x256xf32>, vector<2x256xf32>, vector<2x256xf32>, vector<2x256xf32>, vector<2x256xf32> -> vector<2x2048xf32>
    %c0_8 = arith.constant 0 : index
    %c0_9 = arith.constant 0 : index
    %51 = vector.load %arg4[%c0_8, %c0_9] : memref<2048x64xf32, #tpu.memory_space<vmem>>, vector<2048x64xf32>
    %cst_10 = arith.constant dense<0.000000e+00> : vector<2x64xf32>
    %52 = tpu.matmul %50, %51, %cst_10 {dimension_numbers = #tpu.dot_dimension_numbers<[1], [0], [0], [1], [0, 0, 1, 1], [], []>} : vector<2x2048xf32>, vector<2048x64xf32>, vector<2x64xf32> -> vector<2x64xf32>
    %c0_11 = arith.constant 0 : index
    %c0_12 = arith.constant 0 : index
    %53 = vector.load %arg5[%c0_11, %c0_12] : memref<1x64xf32, #tpu.memory_space<vmem>>, vector<1x64xf32>
    %54 = vector.broadcast %53 : vector<1x64xf32> to vector<2x64xf32>
    %55 = arith.addf %52, %54 : vector<2x64xf32>
    %56 = vector.extract_strided_slice %55 {offsets = [0, 0], sizes = [2, 32], strides = [1, 1]} : vector<2x64xf32> to vector<2x32xf32>
    %cst_13 = arith.constant 5.000000e-01 : f32
    %57 = vector.broadcast %cst_13 : f32 to vector<2x64xf32>
    %58 = arith.mulf %57, %55 : vector<2x64xf32>
    %59 = math.exp %58 : vector<2x64xf32>
    %60 = vector.extract_strided_slice %59 {offsets = [0, 32], sizes = [2, 32], strides = [1, 1]} : vector<2x64xf32> to vector<2x32xf32>
    %c0_14 = arith.constant 0 : index
    %c0_15 = arith.constant 0 : index
    %61 = vector.load %arg6[%c0_14, %c0_15] : memref<2x32xf32, #tpu.memory_space<vmem>>, vector<2x32xf32>
    %62 = arith.mulf %60, %61 : vector<2x32xf32>
    %63 = arith.addf %56, %62 : vector<2x32xf32>
    %64 = tpu.iota {dimensions = array<i32: 1>} : vector<2x64xi32>
    %c32_i32 = arith.constant 32 : i32
    %65 = vector.broadcast %c32_i32 : i32 to vector<2x64xi32>
    %66 = arith.cmpi slt, %64, %65 : vector<2x64xi32>
    %67 = arith.select %66, %55, %59 : vector<2x64xi1>, vector<2x64xf32>
    %c0_16 = arith.constant 0 : index
    %c0_17 = arith.constant 0 : index
    %68 = vector.load %arg12[%c0_16, %c0_17] : memref<2x64xf32, #tpu.memory_space<vmem>>, vector<2x64xf32>
    tpu.vector_store %arg12[%c0_16, %c0_17], %67 {strides = array<i32>} : memref<2x64xf32, #tpu.memory_space<vmem>>, vector<2x64xf32>,
    %c0_18 = arith.constant 0 : index
    %c0_19 = arith.constant 0 : index
    %69 = vector.load %arg7[%c0_18, %c0_19] : memref<32x2048xf32, #tpu.memory_space<vmem>>, vector<32x2048xf32>
    %cst_20 = arith.constant dense<0.000000e+00> : vector<2x2048xf32>
    %70 = tpu.matmul %63, %69, %cst_20 {dimension_numbers = #tpu.dot_dimension_numbers<[1], [0], [0], [1], [0, 0, 1, 1], [], []>} : vector<2x32xf32>, vector<32x2048xf32>, vector<2x2048xf32> -> vector<2x2048xf32>
    %c0_21 = arith.constant 0 : index
    %c0_22 = arith.constant 0 : index
    %71 = vector.load %arg8[%c0_21, %c0_22] : memref<1x2048xf32, #tpu.memory_space<vmem>>, vector<1x2048xf32>
    %72 = vector.broadcast %71 : vector<1x2048xf32> to vector<2x2048xf32>
    %73 = arith.addf %70, %72 : vector<2x2048xf32>
    %cst_23 = arith.constant 0.000000e+00 : f32
    %74 = vector.broadcast %cst_23 : f32 to vector<2x2048xf32>
    %75 = arith.maximumf %73, %74 : vector<2x2048xf32>
    %76 = vector.extract_strided_slice %75 {offsets = [0, 0], sizes = [2, 256], strides = [1, 1]} : vector<2x2048xf32> to vector<2x256xf32>
    %77 = vector.extract_strided_slice %75 {offsets = [0, 256], sizes = [2, 256], strides = [1, 1]} : vector<2x2048xf32> to vector<2x256xf32>
    %78 = vector.extract_strided_slice %75 {offsets = [0, 512], sizes = [2, 256], strides = [1, 1]} : vector<2x2048xf32> to vector<2x256xf32>
    %79 = vector.extract_strided_slice %75 {offsets = [0, 768], sizes = [2, 256], strides = [1, 1]} : vector<2x2048xf32> to vector<2x256xf32>
    %80 = vector.extract_strided_slice %75 {offsets = [0, 1024], sizes = [2, 256], strides = [1, 1]} : vector<2x2048xf32> to vector<2x256xf32>
    %81 = vector.extract_strided_slice %75 {offsets = [0, 1280], sizes = [2, 256], strides = [1, 1]} : vector<2x2048xf32> to vector<2x256xf32>
    %82 = vector.extract_strided_slice %75 {offsets = [0, 1536], sizes = [2, 256], strides = [1, 1]} : vector<2x2048xf32> to vector<2x256xf32>
    %83 = vector.extract_strided_slice %75 {offsets = [0, 1792], sizes = [2, 256], strides = [1, 1]} : vector<2x2048xf32> to vector<2x256xf32>
    %84 = tpu.concatenate %76, %77, %78, %79, %80, %81, %82, %83 in 0 : vector<2x256xf32>, vector<2x256xf32>, vector<2x256xf32>, vector<2x256xf32>, vector<2x256xf32>, vector<2x256xf32>, vector<2x256xf32>, vector<2x256xf32> -> vector<16x256xf32>
    %c0_24 = arith.constant 0 : index
    %c0_25 = arith.constant 0 : index
    %85 = vector.load %arg9[%c0_24, %c0_25] : memref<8x144xf32, #tpu.memory_space<vmem>>, vector<8x144xf32>
    %c17_i32_26 = arith.constant 17 : i32
    %86 = tpu.dynamic_rotate %84 by %c17_i32_26 dim 1 : vector<16x256xf32>, i32 -> vector<16x256xf32>
    %87 = vector.extract_strided_slice %0 {offsets = [0, 0], sizes = [1, 256], strides = [1, 1]} : vector<9x256xf32> to vector<1x256xf32>
    %88 = vector.broadcast %87 : vector<1x256xf32> to vector<16x256xf32>
    %89 = arith.mulf %86, %88 : vector<16x256xf32>
    %c16_i32_27 = arith.constant 16 : i32
    %90 = tpu.dynamic_rotate %84 by %c16_i32_27 dim 1 : vector<16x256xf32>, i32 -> vector<16x256xf32>
    %91 = vector.extract_strided_slice %0 {offsets = [1, 0], sizes = [1, 256], strides = [1, 1]} : vector<9x256xf32> to vector<1x256xf32>
    %92 = vector.broadcast %91 : vector<1x256xf32> to vector<16x256xf32>
    %93 = arith.mulf %90, %92 : vector<16x256xf32>
    %c15_i32_28 = arith.constant 15 : i32
    %94 = tpu.dynamic_rotate %84 by %c15_i32_28 dim 1 : vector<16x256xf32>, i32 -> vector<16x256xf32>
    %95 = vector.extract_strided_slice %0 {offsets = [2, 0], sizes = [1, 256], strides = [1, 1]} : vector<9x256xf32> to vector<1x256xf32>
    %96 = vector.broadcast %95 : vector<1x256xf32> to vector<16x256xf32>
    %97 = arith.mulf %94, %96 : vector<16x256xf32>
    %c1_i32_29 = arith.constant 1 : i32
    %98 = tpu.dynamic_rotate %84 by %c1_i32_29 dim 1 : vector<16x256xf32>, i32 -> vector<16x256xf32>
    %99 = vector.extract_strided_slice %0 {offsets = [3, 0], sizes = [1, 256], strides = [1, 1]} : vector<9x256xf32> to vector<1x256xf32>
    %100 = vector.broadcast %99 : vector<1x256xf32> to vector<16x256xf32>
    %101 = arith.mulf %98, %100 : vector<16x256xf32>
    %c255_i32_30 = arith.constant 255 : i32
    %102 = tpu.dynamic_rotate %84 by %c255_i32_30 dim 1 : vector<16x256xf32>, i32 -> vector<16x256xf32>
    %103 = vector.extract_strided_slice %0 {offsets = [5, 0], sizes = [1, 256], strides = [1, 1]} : vector<9x256xf32> to vector<1x256xf32>
    %104 = vector.broadcast %103 : vector<1x256xf32> to vector<16x256xf32>
    %105 = arith.mulf %102, %104 : vector<16x256xf32>
    %c241_i32_31 = arith.constant 241 : i32
    %106 = tpu.dynamic_rotate %84 by %c241_i32_31 dim 1 : vector<16x256xf32>, i32 -> vector<16x256xf32>
    %107 = vector.extract_strided_slice %0 {offsets = [6, 0], sizes = [1, 256], strides = [1, 1]} : vector<9x256xf32> to vector<1x256xf32>
    %108 = vector.broadcast %107 : vector<1x256xf32> to vector<16x256xf32>
    %109 = arith.mulf %106, %108 : vector<16x256xf32>
    %c240_i32_32 = arith.constant 240 : i32
    %110 = tpu.dynamic_rotate %84 by %c240_i32_32 dim 1 : vector<16x256xf32>, i32 -> vector<16x256xf32>
    %111 = vector.extract_strided_slice %0 {offsets = [7, 0], sizes = [1, 256], strides = [1, 1]} : vector<9x256xf32> to vector<1x256xf32>
    %112 = vector.broadcast %111 : vector<1x256xf32> to vector<16x256xf32>
    %113 = arith.mulf %110, %112 : vector<16x256xf32>
    %c239_i32_33 = arith.constant 239 : i32
    %114 = tpu.dynamic_rotate %84 by %c239_i32_33 dim 1 : vector<16x256xf32>, i32 -> vector<16x256xf32>
    %115 = vector.extract_strided_slice %0 {offsets = [8, 0], sizes = [1, 256], strides = [1, 1]} : vector<9x256xf32> to vector<1x256xf32>
    %116 = vector.broadcast %115 : vector<1x256xf32> to vector<16x256xf32>
    %117 = arith.mulf %114, %116 : vector<16x256xf32>
    %118 = tpu.concatenate %89, %93, %97, %101, %84, %105, %109, %113, %117 in 0 : vector<16x256xf32>, vector<16x256xf32>, vector<16x256xf32>, vector<16x256xf32>, vector<16x256xf32>, vector<16x256xf32>, vector<16x256xf32>, vector<16x256xf32>, vector<16x256xf32> -> vector<144x256xf32>
    %cst_34 = arith.constant dense<0.000000e+00> : vector<8x256xf32>
    %119 = tpu.matmul %85, %118, %cst_34 {dimension_numbers = #tpu.dot_dimension_numbers<[1], [0], [0], [1], [0, 0, 1, 1], [], []>} : vector<8x144xf32>, vector<144x256xf32>, vector<8x256xf32> -> vector<8x256xf32>
    %c0_35 = arith.constant 0 : index
    %c0_36 = arith.constant 0 : index
    %120 = vector.load %arg10[%c0_35, %c0_36] : memref<8x1xf32, #tpu.memory_space<vmem>>, vector<8x1xf32>
    %121 = vector.broadcast %120 : vector<8x1xf32> to vector<8x256xf32>
    %122 = arith.addf %119, %121 : vector<8x256xf32>
    %cst_37 = arith.constant 5.000000e-01 : f32
    %123 = vector.broadcast %cst_37 : f32 to vector<8x256xf32>
    %124 = arith.mulf %123, %122 : vector<8x256xf32>
    %125 = math.tanh %124 : vector<8x256xf32>
    %cst_38 = arith.constant 1.000000e+00 : f32
    %126 = vector.broadcast %cst_38 : f32 to vector<8x256xf32>
    %127 = arith.addf %125, %126 : vector<8x256xf32>
    %cst_39 = arith.constant 5.000000e-01 : f32
    %128 = vector.broadcast %cst_39 : f32 to vector<8x256xf32>
    %129 = arith.mulf %128, %127 : vector<8x256xf32>
    %c0_40 = arith.constant 0 : index
    %c0_41 = arith.constant 0 : index
    %130 = vector.load %arg11[%c0_40, %c0_41] : memref<8x256xf32, #tpu.memory_space<vmem>>, vector<8x256xf32>
    tpu.vector_store %arg11[%c0_40, %c0_41], %129 {strides = array<i32>} : memref<8x256xf32, #tpu.memory_space<vmem>>, vector<8x256xf32>,
    return
  }
}

</mosaic_0001>

<llo_original>
// kernel: autoencoder_forward.1
$region0: #{autoencoder_forward.1}
  #allocation0 [shape = 'u32[]', space=smem, size = 0x4, offset = 0x4, fixed_abs, tag = 'smem constant byte address 0x4 - core index']
  #allocation1 [shape = 'u32[72,128]{1,0:T(1,128)}', space=vmem, size = 0x9000, scoped, tag = 'internal scratch']
  %s0 = inlined_call_operand.vmem [shape: f32[8,256], index: 0, kind: input, shape index: {}]
  %s1 = inlined_call_operand.vmem [shape: f32[9,256], index: 1, kind: input, shape index: {}]
  %s2 = inlined_call_operand.vmem [shape: f32[16,72], index: 2, kind: input, shape index: {}]
  %s3 = inlined_call_operand.vmem [shape: f32[16,1], index: 3, kind: input, shape index: {}]
  %s4 = inlined_call_operand.vmem [shape: f32[2048,64], index: 4, kind: input, shape index: {}]
  %s5 = inlined_call_operand.vmem [shape: f32[1,64], index: 5, kind: input, shape index: {}]
  %s6 = inlined_call_operand.vmem [shape: f32[2,32], index: 6, kind: input, shape index: {}]
  %s7 = inlined_call_operand.vmem [shape: f32[32,2048], index: 7, kind: input, shape index: {}]
  %s8 = inlined_call_operand.vmem [shape: f32[1,2048], index: 8, kind: input, shape index: {}]
  %s9 = inlined_call_operand.vmem [shape: f32[8,144], index: 9, kind: input, shape index: {}]
  %s10 = inlined_call_operand.vmem [shape: f32[8,1], index: 10, kind: input, shape index: {}]
  %s11 = inlined_call_operand.vmem [shape: f32[8,256], index: 11, kind: output, shape index: {0}]
  %s12 = inlined_call_operand.vmem [shape: f32[2,64], index: 12, kind: output, shape index: {1}]
  %13 = xla_tuple %s11, %s12
  %s14 = sld [smem:[#allocation0]]
  $region62: #{autoencoder_forward.1} parent=0
    _
  %s16 = ssub.s32 1, %s14
  %s17 = scalar_select 0, %s16, %s14
  // Predicated region
  $region2: #{autoencoder_forward.1} parent=0 // pred_check
    _
  $region3: #{autoencoder_forward.1} parent=0 // pred_check_branch
    %19 = sbr.rel (0) target = $region5
  $region4: #{autoencoder_forward.1} parent=0 // pred_region
    _
  $region5: #{autoencoder_forward.1} parent=0 // pred_fallthru
    _
  // Predicated region
  $region6: #{autoencoder_forward.1} parent=0 // pred_check
    _
  $region7: #{autoencoder_forward.1} parent=0 // pred_check_branch
    %21 = sbr.rel (0) target = $region9
  $region8: #{autoencoder_forward.1} parent=0 // pred_region
    _
  $region9: #{autoencoder_forward.1} parent=0 // pred_fallthru
    _
  // Predicated region
  $region10: #{autoencoder_forward.1} parent=0 // pred_check
    _
  $region11: #{autoencoder_forward.1} parent=0 // pred_check_branch
    %23 = sbr.rel (0) target = $region13
  $region12: #{autoencoder_forward.1} parent=0 // pred_region
    _
  $region13: #{autoencoder_forward.1} parent=0 // pred_fallthru
    _
  // Predicated region
  $region14: #{autoencoder_forward.1} parent=0 // pred_check
    _
  $region15: #{autoencoder_forward.1} parent=0 // pred_check_branch
    %25 = sbr.rel (0) target = $region17
  $region16: #{autoencoder_forward.1} parent=0 // pred_region
    _
  $region17: #{autoencoder_forward.1} parent=0 // pred_fallthru
    _
  // Predicated region
  $region18: #{autoencoder_forward.1} parent=0 // pred_check
    _
  $region19: #{autoencoder_forward.1} parent=0 // pred_check_branch
    %27 = sbr.rel (0) target = $region21
  $region20: #{autoencoder_forward.1} parent=0 // pred_region
    _
  $region21: #{autoencoder_forward.1} parent=0 // pred_fallthru
    _
  // Predicated region
  $region22: #{autoencoder_forward.1} parent=0 // pred_check
    _
  $region23: #{autoencoder_forward.1} parent=0 // pred_check_branch
    %29 = sbr.rel (0) target = $region25
  $region24: #{autoencoder_forward.1} parent=0 // pred_region
    _
  $region25: #{autoencoder_forward.1} parent=0 // pred_fallthru
    _
  // Predicated region
  $region26: #{autoencoder_forward.1} parent=0 // pred_check
    _
  $region27: #{autoencoder_forward.1} parent=0 // pred_check_branch
    %31 = sbr.rel (0) target = $region29
  $region28: #{autoencoder_forward.1} parent=0 // pred_region
    _
  $region29: #{autoencoder_forward.1} parent=0 // pred_fallthru
    _
  // Predicated region
  $region30: #{autoencoder_forward.1} parent=0 // pred_check
    _
  $region31: #{autoencoder_forward.1} parent=0 // pred_check_branch
    %33 = sbr.rel (0) target = $region33
  $region32: #{autoencoder_forward.1} parent=0 // pred_region
    _
  $region33: #{autoencoder_forward.1} parent=0 // pred_fallthru
    _
  // Predicated region
  $region34: #{autoencoder_forward.1} parent=0 // pred_check
    _
  $region35: #{autoencoder_forward.1} parent=0 // pred_check_branch
    %35 = sbr.rel (0) target = $region37
  $region36: #{autoencoder_forward.1} parent=0 // pred_region
    _
  $region37: #{autoencoder_forward.1} parent=0 // pred_fallthru
    _
  // Predicated region
  $region38: #{autoencoder_forward.1} parent=0 // pred_check
    _
  $region39: #{autoencoder_forward.1} parent=0 // pred_check_branch
    %37 = sbr.rel (0) target = $region41
  $region40: #{autoencoder_forward.1} parent=0 // pred_region
    _
  $region41: #{autoencoder_forward.1} parent=0 // pred_fallthru
    _
  // Predicated region
  $region42: #{autoencoder_forward.1} parent=0 // pred_check
    _
  $region43: #{autoencoder_forward.1} parent=0 // pred_check_branch
    %39 = sbr.rel (0) target = $region45
  $region44: #{autoencoder_forward.1} parent=0 // pred_region
    _
  $region45: #{autoencoder_forward.1} parent=0 // pred_fallthru
    _
  %v40 = vld [vmem:[%s1] sm:$0xff]
  %v41 = vld [vmem:[%s1 + $0x8] sm:$0xff]
  %v42 = vld [vmem:[%s1 + $0x10] sm:$0x1]
  %v43 = vld [vmem:[%s1 + $0x18] sm:$0x1]
  %v44 = vld [vmem:[%s2] sm:$0xff]
  %v45 = vld [vmem:[%s2 + $0x8] sm:$0xff]
  %v46 = vld [vmem:[%s0] sm:$0xff]
  %v47 = vld [vmem:[%s0 + $0x8] sm:$0xff]
  %48 = vrot.lane.b32.xlu0 %v46, 17
  %v49 = vpop.permute.xlu0 %48
  %50 = vrot.lane.b32.xlu0 %v47, 17
  %v51 = vpop.permute.xlu0 %50
  %v52 = vlaneseq
  %v53 = vand.u32 %v52, 127
  %vm54 = vcmp.lt.s32.totalorder %v53, 17
  %v55 = vsel %vm54, %v49, %v51
  %v56 = vsel %vm54, %v51, %v49
  %v57 = vperm.slane %v40, 0
  %v58 = vperm.slane %v41, 0
  %v59 = vmul.f32 %v56, %v57
  %v60 = vmul.f32 %v55, %v58
  %61 = vrot.lane.b32.xlu0 %v46, 16
  %v62 = vpop.permute.xlu0 %61
  %63 = vrot.lane.b32.xlu0 %v47, 16
  %v64 = vpop.permute.xlu0 %63
  %vm65 = vcmp.lt.s32.totalorder %v53, 16
  %v66 = vsel %vm65, %v62, %v64
  %v67 = vsel %vm65, %v64, %v62
  %v68 = vperm.slane %v40, 1
  %v69 = vperm.slane %v41, 1
  %v70 = vmul.f32 %v67, %v68
  %v71 = vmul.f32 %v66, %v69
  %72 = vrot.lane.b32.xlu0 %v46, 15
  %v73 = vpop.permute.xlu0 %72
  %74 = vrot.lane.b32.xlu0 %v47, 15
  %v75 = vpop.permute.xlu0 %74
  %vm76 = vcmp.lt.s32.totalorder %v53, 15
  %v77 = vsel %vm76, %v73, %v75
  %v78 = vsel %vm76, %v75, %v73
  %v79 = vperm.slane %v40, 2
  %v80 = vperm.slane %v41, 2
  %v81 = vmul.f32 %v78, %v79
  %v82 = vmul.f32 %v77, %v80
  %83 = vrot.lane.b32.xlu0 %v46, 1
  %v84 = vpop.permute.xlu0 %83
  %85 = vrot.lane.b32.xlu0 %v47, 1
  %v86 = vpop.permute.xlu0 %85
  %vm87 = vcmp.lt.s32.totalorder %v53, 1
  %v88 = vsel %vm87, %v84, %v86
  %v89 = vsel %vm87, %v86, %v84
  %v90 = vperm.slane %v40, 3
  %v91 = vperm.slane %v41, 3
  %v92 = vmul.f32 %v89, %v90
  %v93 = vmul.f32 %v88, %v91
  %94 = vrot.lane.b32.xlu0 %v46, 127
  %v95 = vpop.permute.xlu0 %94
  %96 = vrot.lane.b32.xlu0 %v47, 127
  %v97 = vpop.permute.xlu0 %96
  %vm98 = vcmp.lt.s32.totalorder %v53, 127
  %v99 = vsel %vm98, %v95, %v97
  %v100 = vsel %vm98, %v97, %v95
  %v101 = vperm.slane %v40, 5
  %v102 = vperm.slane %v41, 5
  %v103 = vmul.f32 %v99, %v101
  %v104 = vmul.f32 %v100, %v102
  %105 = vrot.lane.b32.xlu0 %v46, 113
  %v106 = vpop.permute.xlu0 %105
  %107 = vrot.lane.b32.xlu0 %v47, 113
  %v108 = vpop.permute.xlu0 %107
  %vm109 = vcmp.lt.s32.totalorder %v53, 113
  %v110 = vsel %vm109, %v106, %v108
  %v111 = vsel %vm109, %v108, %v106
  %v112 = vperm.slane %v40, 6
  %v113 = vperm.slane %v41, 6
  %v114 = vmul.f32 %v110, %v112
  %v115 = vmul.f32 %v111, %v113
  %116 = vrot.lane.b32.xlu0 %v46, 112
  %v117 = vpop.permute.xlu0 %116
  %118 = vrot.lane.b32.xlu0 %v47, 112
  %v119 = vpop.permute.xlu0 %118
  %vm120 = vcmp.lt.s32.totalorder %v53, 112
  %v121 = vsel %vm120, %v117, %v119
  %v122 = vsel %vm120, %v119, %v117
  %v123 = vperm.slane %v40, 7
  %v124 = vperm.slane %v41, 7
  %v125 = vmul.f32 %v121, %v123
  %v126 = vmul.f32 %v122, %v124
  %127 = vrot.lane.b32.xlu0 %v46, 111
  %v128 = vpop.permute.xlu0 %127
  %129 = vrot.lane.b32.xlu0 %v47, 111
  %v130 = vpop.permute.xlu0 %129
  %vm131 = vcmp.lt.s32.totalorder %v53, 111
  %v132 = vsel %vm131, %v128, %v130
  %v133 = vsel %vm131, %v130, %v128
  %v134 = vperm.slane %v42, 0
  %v135 = vperm.slane %v43, 0
  %v136 = vmul.f32 %v132, %v134
  %v137 = vmul.f32 %v133, %v135
  %v138 = vld [vmem:[%s3] sm:$0xff]
  %v139 = vld [vmem:[%s3 + $0x8] sm:$0xff]
  %141 = vset.pattern.permute.xlu0 0
  %142 = vperm.xlu0 %141, %v138
  %v143 = vpop.permute.xlu0 %142
  %146 = vset.pattern.permute.xlu0 0
  %147 = vperm.xlu0 %146, %v139
  %v148 = vpop.permute.xlu0 %147
  %vm150 = vcmask 588800
  %v152 = vsel %vm150, %v44, 0
  %v155 = vsel %vm150, %v45, 0
  %157 = vmatpush.msra.mxu0 0.0
  %158 = vmatpush.msra.mxu0 0.0
  %159 = vmatpush.msra.mxu0 0.0
  %160 = vmatpush.msra.mxu0 0.0
  %161 = vmatpush.msra.mxu0 0.0
  %162 = vmatpush.msra.mxu0 0.0
  %163 = vmatpush.msra.mxu0 0.0
  %164 = vmatpush.msra.mxu0 %v136
  %165 = vmatpush.msra.mxu0 %v125
  %166 = vmatpush.msra.mxu0 %v114
  %167 = vmatpush.msra.mxu0 %v103
  %168 = vmatpush.msra.mxu0 %v46
  %169 = vmatpush.msra.mxu0 %v92
  %170 = vmatpush.msra.mxu0 %v81
  %171 = vmatpush.msra.mxu0 %v70
  %172 = vmatpush.msra.mxu0 %v59
  %173 = vmatmul.f32.gmra.mxu0 %v152
  %v174 = vpop.f32.mrf.mxu0
  %v175 = vadd.f32 %v143, %v174
  %176 = vmatmul.f32.gmra.mxu0 %v155
  %v177 = vpop.f32.mrf.mxu0
  %v178 = vadd.f32 %v148, %v177
  %179 = vdwg.mxu0
  %180 = vmatpush.msra.mxu0 0.0
  %181 = vmatpush.msra.mxu0 0.0
  %182 = vmatpush.msra.mxu0 0.0
  %183 = vmatpush.msra.mxu0 0.0
  %184 = vmatpush.msra.mxu0 0.0
  %185 = vmatpush.msra.mxu0 0.0
  %186 = vmatpush.msra.mxu0 0.0
  %187 = vmatpush.msra.mxu0 %v137
  %188 = vmatpush.msra.mxu0 %v126
  %189 = vmatpush.msra.mxu0 %v115
  %190 = vmatpush.msra.mxu0 %v104
  %191 = vmatpush.msra.mxu0 %v47
  %192 = vmatpush.msra.mxu0 %v93
  %193 = vmatpush.msra.mxu0 %v82
  %194 = vmatpush.msra.mxu0 %v71
  %195 = vmatpush.msra.mxu0 %v60
  %196 = vmatmul.f32.gmra.mxu0 %v152
  %v197 = vpop.f32.mrf.mxu0
  %v198 = vadd.f32 %v143, %v197
  %199 = vmatmul.f32.gmra.mxu0 %v155
  %v200 = vpop.f32.mrf.mxu0
  %v201 = vadd.f32 %v148, %v200
  %202 = vdwg.mxu0
  %v203 = vmax.f32 %v175, 0.0
  %v204 = vmax.f32 %v198, 0.0
  %v205 = vmax.f32 %v178, 0.0
  %v206 = vmax.f32 %v201, 0.0
  %v209 = vrot.slane %v203, 2
  %v210 = vrot.slane %v204, 2
  %v213 = vrot.slane %v203, 4
  %v214 = vrot.slane %v204, 4
  %v217 = vrot.slane %v203, 6
  %v218 = vrot.slane %v204, 6
  %v223 = vrot.slane %v205, 2
  %v224 = vrot.slane %v206, 2
  %v227 = vrot.slane %v205, 4
  %v228 = vrot.slane %v206, 4
  %v231 = vrot.slane %v205, 6
  %v232 = vrot.slane %v206, 6
  %v235 = vld [vmem:[%s4] sm:$0xff]
  %v236 = vld [vmem:[%s4 + $0x8] sm:$0xff]
  %v237 = vld [vmem:[%s4 + $0x10] sm:$0xff]
  %v238 = vld [vmem:[%s4 + $0x18] sm:$0xff]
  %v239 = vld [vmem:[%s4 + $0x20] sm:$0xff]
  %v240 = vld [vmem:[%s4 + $0x28] sm:$0xff]
  %v241 = vld [vmem:[%s4 + $0x30] sm:$0xff]
  %v242 = vld [vmem:[%s4 + $0x38] sm:$0xff]
  %v243 = vld [vmem:[%s4 + $0x40] sm:$0xff]
  %v244 = vld [vmem:[%s4 + $0x48] sm:$0xff]
  %v245 = vld [vmem:[%s4 + $0x50] sm:$0xff]
  %v246 = vld [vmem:[%s4 + $0x58] sm:$0xff]
  %v247 = vld [vmem:[%s4 + $0x60] sm:$0xff]
  %v248 = vld [vmem:[%s4 + $0x68] sm:$0xff]
  %v249 = vld [vmem:[%s4 + $0x70] sm:$0xff]
  %v250 = vld [vmem:[%s4 + $0x78] sm:$0xff]
  %v251 = vld [vmem:[%s4 + $0x80] sm:$0xff]
  %v252 = vld [vmem:[%s4 + $0x88] sm:$0xff]
  %v253 = vld [vmem:[%s4 + $0x90] sm:$0xff]
  %v254 = vld [vmem:[%s4 + $0x98] sm:$0xff]
  %v255 = vld [vmem:[%s4 + $0xa0] sm:$0xff]
  %v256 = vld [vmem:[%s4 + $0xa8] sm:$0xff]
  %v257 = vld [vmem:[%s4 + $0xb0] sm:$0xff]
  %v258 = vld [vmem:[%s4 + $0xb8] sm:$0xff]
  %v259 = vld [vmem:[%s4 + $0xc0] sm:$0xff]
  %v260 = vld [vmem:[%s4 + $0xc8] sm:$0xff]
  %v261 = vld [vmem:[%s4 + $0xd0] sm:$0xff]
  %v262 = vld [vmem:[%s4 + $0xd8] sm:$0xff]
  %v263 = vld [vmem:[%s4 + $0xe0] sm:$0xff]
  %v264 = vld [vmem:[%s4 + $0xe8] sm:$0xff]
  %v265 = vld [vmem:[%s4 + $0xf0] sm:$0xff]
  %v266 = vld [vmem:[%s4 + $0xf8] sm:$0xff]
  %v267 = vld [vmem:[%s4 + $0x100] sm:$0xff]
  %v268 = vld [vmem:[%s4 + $0x108] sm:$0xff]
  %v269 = vld [vmem:[%s4 + $0x110] sm:$0xff]
  %v270 = vld [vmem:[%s4 + $0x118] sm:$0xff]
  %v271 = vld [vmem:[%s4 + $0x120] sm:$0xff]
  %v272 = vld [vmem:[%s4 + $0x128] sm:$0xff]
  %v273 = vld [vmem:[%s4 + $0x130] sm:$0xff]
  %v274 = vld [vmem:[%s4 + $0x138] sm:$0xff]
  %v275 = vld [vmem:[%s4 + $0x140] sm:$0xff]
  %v276 = vld [vmem:[%s4 + $0x148] sm:$0xff]
  %v277 = vld [vmem:[%s4 + $0x150] sm:$0xff]
  %v278 = vld [vmem:[%s4 + $0x158] sm:$0xff]
  %v279 = vld [vmem:[%s4 + $0x160] sm:$0xff]
  %v280 = vld [vmem:[%s4 + $0x168] sm:$0xff]
  %v281 = vld [vmem:[%s4 + $0x170] sm:$0xff]
  %v282 = vld [vmem:[%s4 + $0x178] sm:$0xff]
  %v283 = vld [vmem:[%s4 + $0x180] sm:$0xff]
  %v284 = vld [vmem:[%s4 + $0x188] sm:$0xff]
  %v285 = vld [vmem:[%s4 + $0x190] sm:$0xff]
  %v286 = vld [vmem:[%s4 + $0x198] sm:$0xff]
  %v287 = vld [vmem:[%s4 + $0x1a0] sm:$0xff]
  %v288 = vld [vmem:[%s4 + $0x1a8] sm:$0xff]
  %v289 = vld [vmem:[%s4 + $0x1b0] sm:$0xff]
  %v290 = vld [vmem:[%s4 + $0x1b8] sm:$0xff]
  %v291 = vld [vmem:[%s4 + $0x1c0] sm:$0xff]
  %v292 = vld [vmem:[%s4 + $0x1c8] sm:$0xff]
  %v293 = vld [vmem:[%s4 + $0x1d0] sm:$0xff]
  %v294 = vld [vmem:[%s4 + $0x1d8] sm:$0xff]
  %v295 = vld [vmem:[%s4 + $0x1e0] sm:$0xff]
  %v296 = vld [vmem:[%s4 + $0x1e8] sm:$0xff]
  %v297 = vld [vmem:[%s4 + $0x1f0] sm:$0xff]
  %v298 = vld [vmem:[%s4 + $0x1f8] sm:$0xff]
  %v299 = vld [vmem:[%s4 + $0x200] sm:$0xff]
  %v300 = vld [vmem:[%s4 + $0x208] sm:$0xff]
  %v301 = vld [vmem:[%s4 + $0x210] sm:$0xff]
  %v302 = vld [vmem:[%s4 + $0x218] sm:$0xff]
  %v303 = vld [vmem:[%s4 + $0x220] sm:$0xff]
  %v304 = vld [vmem:[%s4 + $0x228] sm:$0xff]
  %v305 = vld [vmem:[%s4 + $0x230] sm:$0xff]
  %v306 = vld [vmem:[%s4 + $0x238] sm:$0xff]
  %v307 = vld [vmem:[%s4 + $0x240] sm:$0xff]
  %v308 = vld [vmem:[%s4 + $0x248] sm:$0xff]
  %v309 = vld [vmem:[%s4 + $0x250] sm:$0xff]
  %v310 = vld [vmem:[%s4 + $0x258] sm:$0xff]
  %v311 = vld [vmem:[%s4 + $0x260] sm:$0xff]
  %v312 = vld [vmem:[%s4 + $0x268] sm:$0xff]
  %v313 = vld [vmem:[%s4 + $0x270] sm:$0xff]
  %v314 = vld [vmem:[%s4 + $0x278] sm:$0xff]
  %v315 = vld [vmem:[%s4 + $0x280] sm:$0xff]
  %v316 = vld [vmem:[%s4 + $0x288] sm:$0xff]
  %v317 = vld [vmem:[%s4 + $0x290] sm:$0xff]
  %v318 = vld [vmem:[%s4 + $0x298] sm:$0xff]
  %v319 = vld [vmem:[%s4 + $0x2a0] sm:$0xff]
  %v320 = vld [vmem:[%s4 + $0x2a8] sm:$0xff]
  %v321 = vld [vmem:[%s4 + $0x2b0] sm:$0xff]
  %v322 = vld [vmem:[%s4 + $0x2b8] sm:$0xff]
  %v323 = vld [vmem:[%s4 + $0x2c0] sm:$0xff]
  %v324 = vld [vmem:[%s4 + $0x2c8] sm:$0xff]
  %v325 = vld [vmem:[%s4 + $0x2d0] sm:$0xff]
  %v326 = vld [vmem:[%s4 + $0x2d8] sm:$0xff]
  %v327 = vld [vmem:[%s4 + $0x2e0] sm:$0xff]
  %v328 = vld [vmem:[%s4 + $0x2e8] sm:$0xff]
  %v329 = vld [vmem:[%s4 + $0x2f0] sm:$0xff]
  %v330 = vld [vmem:[%s4 + $0x2f8] sm:$0xff]
  %v331 = vld [vmem:[%s4 + $0x300] sm:$0xff]
  %v332 = vld [vmem:[%s4 + $0x308] sm:$0xff]
  %v333 = vld [vmem:[%s4 + $0x310] sm:$0xff]
  %v334 = vld [vmem:[%s4 + $0x318] sm:$0xff]
  %v335 = vld [vmem:[%s4 + $0x320] sm:$0xff]
  %v336 = vld [vmem:[%s4 + $0x328] sm:$0xff]
  %v337 = vld [vmem:[%s4 + $0x330] sm:$0xff]
  %v338 = vld [vmem:[%s4 + $0x338] sm:$0xff]
  %v339 = vld [vmem:[%s4 + $0x340] sm:$0xff]
  %v340 = vld [vmem:[%s4 + $0x348] sm:$0xff]
  %v341 = vld [vmem:[%s4 + $0x350] sm:$0xff]
  %v342 = vld [vmem:[%s4 + $0x358] sm:$0xff]
  %v343 = vld [vmem:[%s4 + $0x360] sm:$0xff]
  %v344 = vld [vmem:[%s4 + $0x368] sm:$0xff]
  %v345 = vld [vmem:[%s4 + $0x370] sm:$0xff]
  %v346 = vld [vmem:[%s4 + $0x378] sm:$0xff]
  %v347 = vld [vmem:[%s4 + $0x380] sm:$0xff]
  %v348 = vld [vmem:[%s4 + $0x388] sm:$0xff]
  %v349 = vld [vmem:[%s4 + $0x390] sm:$0xff]
  %v350 = vld [vmem:[%s4 + $0x398] sm:$0xff]
  %v351 = vld [vmem:[%s4 + $0x3a0] sm:$0xff]
  %v352 = vld [vmem:[%s4 + $0x3a8] sm:$0xff]
  %v353 = vld [vmem:[%s4 + $0x3b0] sm:$0xff]
  %v354 = vld [vmem:[%s4 + $0x3b8] sm:$0xff]
  %v355 = vld [vmem:[%s4 + $0x3c0] sm:$0xff]
  %v356 = vld [vmem:[%s4 + $0x3c8] sm:$0xff]
  %v357 = vld [vmem:[%s4 + $0x3d0] sm:$0xff]
  %v358 = vld [vmem:[%s4 + $0x3d8] sm:$0xff]
  %v359 = vld [vmem:[%s4 + $0x3e0] sm:$0xff]
  %v360 = vld [vmem:[%s4 + $0x3e8] sm:$0xff]
  %v361 = vld [vmem:[%s4 + $0x3f0] sm:$0xff]
  %v362 = vld [vmem:[%s4 + $0x3f8] sm:$0xff]
  %v363 = vld [vmem:[%s4 + $0x400] sm:$0xff]
  %v364 = vld [vmem:[%s4 + $0x408] sm:$0xff]
  %v365 = vld [vmem:[%s4 + $0x410] sm:$0xff]
  %v366 = vld [vmem:[%s4 + $0x418] sm:$0xff]
  %v367 = vld [vmem:[%s4 + $0x420] sm:$0xff]
  %v368 = vld [vmem:[%s4 + $0x428] sm:$0xff]
  %v369 = vld [vmem:[%s4 + $0x430] sm:$0xff]
  %v370 = vld [vmem:[%s4 + $0x438] sm:$0xff]
  %v371 = vld [vmem:[%s4 + $0x440] sm:$0xff]
  %v372 = vld [vmem:[%s4 + $0x448] sm:$0xff]
  %v373 = vld [vmem:[%s4 + $0x450] sm:$0xff]
  %v374 = vld [vmem:[%s4 + $0x458] sm:$0xff]
  %v375 = vld [vmem:[%s4 + $0x460] sm:$0xff]
  %v376 = vld [vmem:[%s4 + $0x468] sm:$0xff]
  %v377 = vld [vmem:[%s4 + $0x470] sm:$0xff]
  %v378 = vld [vmem:[%s4 + $0x478] sm:$0xff]
  %v379 = vld [vmem:[%s4 + $0x480] sm:$0xff]
  %v380 = vld [vmem:[%s4 + $0x488] sm:$0xff]
  %v381 = vld [vmem:[%s4 + $0x490] sm:$0xff]
  %v382 = vld [vmem:[%s4 + $0x498] sm:$0xff]
  %v383 = vld [vmem:[%s4 + $0x4a0] sm:$0xff]
  %v384 = vld [vmem:[%s4 + $0x4a8] sm:$0xff]
  %v385 = vld [vmem:[%s4 + $0x4b0] sm:$0xff]
  %v386 = vld [vmem:[%s4 + $0x4b8] sm:$0xff]
  %v387 = vld [vmem:[%s4 + $0x4c0] sm:$0xff]
  %v388 = vld [vmem:[%s4 + $0x4c8] sm:$0xff]
  %v389 = vld [vmem:[%s4 + $0x4d0] sm:$0xff]
  %v390 = vld [vmem:[%s4 + $0x4d8] sm:$0xff]
  %v391 = vld [vmem:[%s4 + $0x4e0] sm:$0xff]
  %v392 = vld [vmem:[%s4 + $0x4e8] sm:$0xff]
  %v393 = vld [vmem:[%s4 + $0x4f0] sm:$0xff]
  %v394 = vld [vmem:[%s4 + $0x4f8] sm:$0xff]
  %v395 = vld [vmem:[%s4 + $0x500] sm:$0xff]
  %v396 = vld [vmem:[%s4 + $0x508] sm:$0xff]
  %v397 = vld [vmem:[%s4 + $0x510] sm:$0xff]
  %v398 = vld [vmem:[%s4 + $0x518] sm:$0xff]
  %v399 = vld [vmem:[%s4 + $0x520] sm:$0xff]
  %v400 = vld [vmem:[%s4 + $0x528] sm:$0xff]
  %v401 = vld [vmem:[%s4 + $0x530] sm:$0xff]
  %v402 = vld [vmem:[%s4 + $0x538] sm:$0xff]
  %v403 = vld [vmem:[%s4 + $0x540] sm:$0xff]
  %v404 = vld [vmem:[%s4 + $0x548] sm:$0xff]
  %v405 = vld [vmem:[%s4 + $0x550] sm:$0xff]
  %v406 = vld [vmem:[%s4 + $0x558] sm:$0xff]
  %v407 = vld [vmem:[%s4 + $0x560] sm:$0xff]
  %v408 = vld [vmem:[%s4 + $0x568] sm:$0xff]
  %v409 = vld [vmem:[%s4 + $0x570] sm:$0xff]
  %v410 = vld [vmem:[%s4 + $0x578] sm:$0xff]
  %v411 = vld [vmem:[%s4 + $0x580] sm:$0xff]
  %v412 = vld [vmem:[%s4 + $0x588] sm:$0xff]
  %v413 = vld [vmem:[%s4 + $0x590] sm:$0xff]
  %v414 = vld [vmem:[%s4 + $0x598] sm:$0xff]
  %v415 = vld [vmem:[%s4 + $0x5a0] sm:$0xff]
  %v416 = vld [vmem:[%s4 + $0x5a8] sm:$0xff]
  %v417 = vld [vmem:[%s4 + $0x5b0] sm:$0xff]
  %v418 = vld [vmem:[%s4 + $0x5b8] sm:$0xff]
  %v419 = vld [vmem:[%s4 + $0x5c0] sm:$0xff]
  %v420 = vld [vmem:[%s4 + $0x5c8] sm:$0xff]
  %v421 = vld [vmem:[%s4 + $0x5d0] sm:$0xff]
  %v422 = vld [vmem:[%s4 + $0x5d8] sm:$0xff]
  %v423 = vld [vmem:[%s4 + $0x5e0] sm:$0xff]
  %v424 = vld [vmem:[%s4 + $0x5e8] sm:$0xff]
  %v425 = vld [vmem:[%s4 + $0x5f0] sm:$0xff]
  %v426 = vld [vmem:[%s4 + $0x5f8] sm:$0xff]
  %v427 = vld [vmem:[%s4 + $0x600] sm:$0xff]
  %v428 = vld [vmem:[%s4 + $0x608] sm:$0xff]
  %v429 = vld [vmem:[%s4 + $0x610] sm:$0xff]
  %v430 = vld [vmem:[%s4 + $0x618] sm:$0xff]
  %v431 = vld [vmem:[%s4 + $0x620] sm:$0xff]
  %v432 = vld [vmem:[%s4 + $0x628] sm:$0xff]
  %v433 = vld [vmem:[%s4 + $0x630] sm:$0xff]
  %v434 = vld [vmem:[%s4 + $0x638] sm:$0xff]
  %v435 = vld [vmem:[%s4 + $0x640] sm:$0xff]
  %v436 = vld [vmem:[%s4 + $0x648] sm:$0xff]
  %v437 = vld [vmem:[%s4 + $0x650] sm:$0xff]
  %v438 = vld [vmem:[%s4 + $0x658] sm:$0xff]
  %v439 = vld [vmem:[%s4 + $0x660] sm:$0xff]
  %v440 = vld [vmem:[%s4 + $0x668] sm:$0xff]
  %v441 = vld [vmem:[%s4 + $0x670] sm:$0xff]
  %v442 = vld [vmem:[%s4 + $0x678] sm:$0xff]
  %v443 = vld [vmem:[%s4 + $0x680] sm:$0xff]
  %v444 = vld [vmem:[%s4 + $0x688] sm:$0xff]
  %v445 = vld [vmem:[%s4 + $0x690] sm:$0xff]
  %v446 = vld [vmem:[%s4 + $0x698] sm:$0xff]
  %v447 = vld [vmem:[%s4 + $0x6a0] sm:$0xff]
  %v448 = vld [vmem:[%s4 + $0x6a8] sm:$0xff]
  %v449 = vld [vmem:[%s4 + $0x6b0] sm:$0xff]
  %v450 = vld [vmem:[%s4 + $0x6b8] sm:$0xff]
  %v451 = vld [vmem:[%s4 + $0x6c0] sm:$0xff]
  %v452 = vld [vmem:[%s4 + $0x6c8] sm:$0xff]
  %v453 = vld [vmem:[%s4 + $0x6d0] sm:$0xff]
  %v454 = vld [vmem:[%s4 + $0x6d8] sm:$0xff]
  %v455 = vld [vmem:[%s4 + $0x6e0] sm:$0xff]
  %v456 = vld [vmem:[%s4 + $0x6e8] sm:$0xff]
  %v457 = vld [vmem:[%s4 + $0x6f0] sm:$0xff]
  %v458 = vld [vmem:[%s4 + $0x6f8] sm:$0xff]
  %v459 = vld [vmem:[%s4 + $0x700] sm:$0xff]
  %v460 = vld [vmem:[%s4 + $0x708] sm:$0xff]
  %v461 = vld [vmem:[%s4 + $0x710] sm:$0xff]
  %v462 = vld [vmem:[%s4 + $0x718] sm:$0xff]
  %v463 = vld [vmem:[%s4 + $0x720] sm:$0xff]
  %v464 = vld [vmem:[%s4 + $0x728] sm:$0xff]
  %v465 = vld [vmem:[%s4 + $0x730] sm:$0xff]
  %v466 = vld [vmem:[%s4 + $0x738] sm:$0xff]
  %v467 = vld [vmem:[%s4 + $0x740] sm:$0xff]
  %v468 = vld [vmem:[%s4 + $0x748] sm:$0xff]
  %v469 = vld [vmem:[%s4 + $0x750] sm:$0xff]
  %v470 = vld [vmem:[%s4 + $0x758] sm:$0xff]
  %v471 = vld [vmem:[%s4 + $0x760] sm:$0xff]
  %v472 = vld [vmem:[%s4 + $0x768] sm:$0xff]
  %v473 = vld [vmem:[%s4 + $0x770] sm:$0xff]
  %v474 = vld [vmem:[%s4 + $0x778] sm:$0xff]
  %v475 = vld [vmem:[%s4 + $0x780] sm:$0xff]
  %v476 = vld [vmem:[%s4 + $0x788] sm:$0xff]
  %v477 = vld [vmem:[%s4 + $0x790] sm:$0xff]
  %v478 = vld [vmem:[%s4 + $0x798] sm:$0xff]
  %v479 = vld [vmem:[%s4 + $0x7a0] sm:$0xff]
  %v480 = vld [vmem:[%s4 + $0x7a8] sm:$0xff]
  %v481 = vld [vmem:[%s4 + $0x7b0] sm:$0xff]
  %v482 = vld [vmem:[%s4 + $0x7b8] sm:$0xff]
  %v483 = vld [vmem:[%s4 + $0x7c0] sm:$0xff]
  %v484 = vld [vmem:[%s4 + $0x7c8] sm:$0xff]
  %v485 = vld [vmem:[%s4 + $0x7d0] sm:$0xff]
  %v486 = vld [vmem:[%s4 + $0x7d8] sm:$0xff]
  %v487 = vld [vmem:[%s4 + $0x7e0] sm:$0xff]
  %v488 = vld [vmem:[%s4 + $0x7e8] sm:$0xff]
  %v489 = vld [vmem:[%s4 + $0x7f0] sm:$0xff]
  %v490 = vld [vmem:[%s4 + $0x7f8] sm:$0xff]
  %v491 = vld [vmem:[%s5] sm:$0x1]
  %v493 = vperm.slane %v491, 0
  %495 = vmatpush.msra.mxu0 %v250
  %496 = vmatpush.msra.mxu0 %v249
  %497 = vmatpush.msra.mxu0 %v248
  %498 = vmatpush.msra.mxu0 %v247
  %499 = vmatpush.msra.mxu0 %v246
  %500 = vmatpush.msra.mxu0 %v245
  %501 = vmatpush.msra.mxu0 %v244
  %502 = vmatpush.msra.mxu0 %v243
  %503 = vmatpush.msra.mxu0 %v242
  %504 = vmatpush.msra.mxu0 %v241
  %505 = vmatpush.msra.mxu0 %v240
  %506 = vmatpush.msra.mxu0 %v239
  %507 = vmatpush.msra.mxu0 %v238
  %508 = vmatpush.msra.mxu0 %v237
  %509 = vmatpush.msra.mxu0 %v236
  %510 = vmatpush.msra.mxu0 %v235
  %511 = vmatmul.f32.gmra.mxu0 %v203
  %v512 = vpop.f32.mrf.mxu0
  %v513 = vadd.f32 %v493, %v512
  %514 = vdwg.mxu0
  %515 = vmatpush.msra.mxu0 %v266
  %516 = vmatpush.msra.mxu0 %v265
  %517 = vmatpush.msra.mxu0 %v264
  %518 = vmatpush.msra.mxu0 %v263
  %519 = vmatpush.msra.mxu0 %v262
  %520 = vmatpush.msra.mxu0 %v261
  %521 = vmatpush.msra.mxu0 %v260
  %522 = vmatpush.msra.mxu0 %v259
  %523 = vmatpush.msra.mxu0 %v258
  %524 = vmatpush.msra.mxu0 %v257
  %525 = vmatpush.msra.mxu0 %v256
  %526 = vmatpush.msra.mxu0 %v255
  %527 = vmatpush.msra.mxu0 %v254
  %528 = vmatpush.msra.mxu0 %v253
  %529 = vmatpush.msra.mxu0 %v252
  %530 = vmatpush.msra.mxu0 %v251
  %531 = vmatmul.f32.gmra.mxu0 %v204
  %v532 = vpop.f32.mrf.mxu0
  %v533 = vadd.f32 %v513, %v532
  %534 = vdwg.mxu0
  %535 = vmatpush.msra.mxu0 %v282
  %536 = vmatpush.msra.mxu0 %v281
  %537 = vmatpush.msra.mxu0 %v280
  %538 = vmatpush.msra.mxu0 %v279
  %539 = vmatpush.msra.mxu0 %v278
  %540 = vmatpush.msra.mxu0 %v277
  %541 = vmatpush.msra.mxu0 %v276
  %542 = vmatpush.msra.mxu0 %v275
  %543 = vmatpush.msra.mxu0 %v274
  %544 = vmatpush.msra.mxu0 %v273
  %545 = vmatpush.msra.mxu0 %v272
  %546 = vmatpush.msra.mxu0 %v271
  %547 = vmatpush.msra.mxu0 %v270
  %548 = vmatpush.msra.mxu0 %v269
  %549 = vmatpush.msra.mxu0 %v268
  %550 = vmatpush.msra.mxu0 %v267
  %551 = vmatmul.f32.gmra.mxu0 %v209
  %v552 = vpop.f32.mrf.mxu0
  %v553 = vadd.f32 %v533, %v552
  %554 = vdwg.mxu0
  %555 = vmatpush.msra.mxu0 %v298
  %556 = vmatpush.msra.mxu0 %v297
  %557 = vmatpush.msra.mxu0 %v296
  %558 = vmatpush.msra.mxu0 %v295
  %559 = vmatpush.msra.mxu0 %v294
  %560 = vmatpush.msra.mxu0 %v293
  %561 = vmatpush.msra.mxu0 %v292
  %562 = vmatpush.msra.mxu0 %v291
  %563 = vmatpush.msra.mxu0 %v290
  %564 = vmatpush.msra.mxu0 %v289
  %565 = vmatpush.msra.mxu0 %v288
  %566 = vmatpush.msra.mxu0 %v287
  %567 = vmatpush.msra.mxu0 %v286
  %568 = vmatpush.msra.mxu0 %v285
  %569 = vmatpush.msra.mxu0 %v284
  %570 = vmatpush.msra.mxu0 %v283
  %571 = vmatmul.f32.gmra.mxu0 %v210
  %v572 = vpop.f32.mrf.mxu0
  %v573 = vadd.f32 %v553, %v572
  %574 = vdwg.mxu0
  %575 = vmatpush.msra.mxu0 %v314
  %576 = vmatpush.msra.mxu0 %v313
  %577 = vmatpush.msra.mxu0 %v312
  %578 = vmatpush.msra.mxu0 %v311
  %579 = vmatpush.msra.mxu0 %v310
  %580 = vmatpush.msra.mxu0 %v309
  %581 = vmatpush.msra.mxu0 %v308
  %582 = vmatpush.msra.mxu0 %v307
  %583 = vmatpush.msra.mxu0 %v306
  %584 = vmatpush.msra.mxu0 %v305
  %585 = vmatpush.msra.mxu0 %v304
  %586 = vmatpush.msra.mxu0 %v303
  %587 = vmatpush.msra.mxu0 %v302
  %588 = vmatpush.msra.mxu0 %v301
  %589 = vmatpush.msra.mxu0 %v300
  %590 = vmatpush.msra.mxu0 %v299
  %591 = vmatmul.f32.gmra.mxu0 %v213
  %v592 = vpop.f32.mrf.mxu0
  %v593 = vadd.f32 %v573, %v592
  %594 = vdwg.mxu0
  %595 = vmatpush.msra.mxu0 %v330
  %596 = vmatpush.msra.mxu0 %v329
  %597 = vmatpush.msra.mxu0 %v328
  %598 = vmatpush.msra.mxu0 %v327
  %599 = vmatpush.msra.mxu0 %v326
  %600 = vmatpush.msra.mxu0 %v325
  %601 = vmatpush.msra.mxu0 %v324
  %602 = vmatpush.msra.mxu0 %v323
  %603 = vmatpush.msra.mxu0 %v322
  %604 = vmatpush.msra.mxu0 %v321
  %605 = vmatpush.msra.mxu0 %v320
  %606 = vmatpush.msra.mxu0 %v319
  %607 = vmatpush.msra.mxu0 %v318
  %608 = vmatpush.msra.mxu0 %v317
  %609 = vmatpush.msra.mxu0 %v316
  %610 = vmatpush.msra.mxu0 %v315
  %611 = vmatmul.f32.gmra.mxu0 %v214
  %v612 = vpop.f32.mrf.mxu0
  %v613 = vadd.f32 %v593, %v612
  %614 = vdwg.mxu0
  %615 = vmatpush.msra.mxu0 %v346
  %616 = vmatpush.msra.mxu0 %v345
  %617 = vmatpush.msra.mxu0 %v344
  %618 = vmatpush.msra.mxu0 %v343
  %619 = vmatpush.msra.mxu0 %v342
  %620 = vmatpush.msra.mxu0 %v341
  %621 = vmatpush.msra.mxu0 %v340
  %622 = vmatpush.msra.mxu0 %v339
  %623 = vmatpush.msra.mxu0 %v338
  %624 = vmatpush.msra.mxu0 %v337
  %625 = vmatpush.msra.mxu0 %v336
  %626 = vmatpush.msra.mxu0 %v335
  %627 = vmatpush.msra.mxu0 %v334
  %628 = vmatpush.msra.mxu0 %v333
  %629 = vmatpush.msra.mxu0 %v332
  %630 = vmatpush.msra.mxu0 %v331
  %631 = vmatmul.f32.gmra.mxu0 %v217
  %v632 = vpop.f32.mrf.mxu0
  %v633 = vadd.f32 %v613, %v632
  %634 = vdwg.mxu0
  %635 = vmatpush.msra.mxu0 %v362
  %636 = vmatpush.msra.mxu0 %v361
  %637 = vmatpush.msra.mxu0 %v360
  %638 = vmatpush.msra.mxu0 %v359
  %639 = vmatpush.msra.mxu0 %v358
  %640 = vmatpush.msra.mxu0 %v357
  %641 = vmatpush.msra.mxu0 %v356
  %642 = vmatpush.msra.mxu0 %v355
  %643 = vmatpush.msra.mxu0 %v354
  %644 = vmatpush.msra.mxu0 %v353
  %645 = vmatpush.msra.mxu0 %v352
  %646 = vmatpush.msra.mxu0 %v351
  %647 = vmatpush.msra.mxu0 %v350
  %648 = vmatpush.msra.mxu0 %v349
  %649 = vmatpush.msra.mxu0 %v348
  %650 = vmatpush.msra.mxu0 %v347
  %651 = vmatmul.f32.gmra.mxu0 %v218
  %v652 = vpop.f32.mrf.mxu0
  %v653 = vadd.f32 %v633, %v652
  %654 = vdwg.mxu0
  %655 = vmatpush.msra.mxu0 %v378
  %656 = vmatpush.msra.mxu0 %v377
  %657 = vmatpush.msra.mxu0 %v376
  %658 = vmatpush.msra.mxu0 %v375
  %659 = vmatpush.msra.mxu0 %v374
  %660 = vmatpush.msra.mxu0 %v373
  %661 = vmatpush.msra.mxu0 %v372
  %662 = vmatpush.msra.mxu0 %v371
  %663 = vmatpush.msra.mxu0 %v370
  %664 = vmatpush.msra.mxu0 %v369
  %665 = vmatpush.msra.mxu0 %v368
  %666 = vmatpush.msra.mxu0 %v367
  %667 = vmatpush.msra.mxu0 %v366
  %668 = vmatpush.msra.mxu0 %v365
  %669 = vmatpush.msra.mxu0 %v364
  %670 = vmatpush.msra.mxu0 %v363
  %671 = vmatmul.f32.gmra.mxu0 %v205
  %v672 = vpop.f32.mrf.mxu0
  %v673 = vadd.f32 %v653, %v672
  %674 = vdwg.mxu0
  %675 = vmatpush.msra.mxu0 %v394
  %676 = vmatpush.msra.mxu0 %v393
  %677 = vmatpush.msra.mxu0 %v392
  %678 = vmatpush.msra.mxu0 %v391
  %679 = vmatpush.msra.mxu0 %v390
  %680 = vmatpush.msra.mxu0 %v389
  %681 = vmatpush.msra.mxu0 %v388
  %682 = vmatpush.msra.mxu0 %v387
  %683 = vmatpush.msra.mxu0 %v386
  %684 = vmatpush.msra.mxu0 %v385
  %685 = vmatpush.msra.mxu0 %v384
  %686 = vmatpush.msra.mxu0 %v383
  %687 = vmatpush.msra.mxu0 %v382
  %688 = vmatpush.msra.mxu0 %v381
  %689 = vmatpush.msra.mxu0 %v380
  %690 = vmatpush.msra.mxu0 %v379
  %691 = vmatmul.f32.gmra.mxu0 %v206
  %v692 = vpop.f32.mrf.mxu0
  %v693 = vadd.f32 %v673, %v692
  %694 = vdwg.mxu0
  %695 = vmatpush.msra.mxu0 %v410
  %696 = vmatpush.msra.mxu0 %v409
  %697 = vmatpush.msra.mxu0 %v408
  %698 = vmatpush.msra.mxu0 %v407
  %699 = vmatpush.msra.mxu0 %v406
  %700 = vmatpush.msra.mxu0 %v405
  %701 = vmatpush.msra.mxu0 %v404
  %702 = vmatpush.msra.mxu0 %v403
  %703 = vmatpush.msra.mxu0 %v402
  %704 = vmatpush.msra.mxu0 %v401
  %705 = vmatpush.msra.mxu0 %v400
  %706 = vmatpush.msra.mxu0 %v399
  %707 = vmatpush.msra.mxu0 %v398
  %708 = vmatpush.msra.mxu0 %v397
  %709 = vmatpush.msra.mxu0 %v396
  %710 = vmatpush.msra.mxu0 %v395
  %711 = vmatmul.f32.gmra.mxu0 %v223
  %v712 = vpop.f32.mrf.mxu0
  %v713 = vadd.f32 %v693, %v712
  %714 = vdwg.mxu0
  %715 = vmatpush.msra.mxu0 %v426
  %716 = vmatpush.msra.mxu0 %v425
  %717 = vmatpush.msra.mxu0 %v424
  %718 = vmatpush.msra.mxu0 %v423
  %719 = vmatpush.msra.mxu0 %v422
  %720 = vmatpush.msra.mxu0 %v421
  %721 = vmatpush.msra.mxu0 %v420
  %722 = vmatpush.msra.mxu0 %v419
  %723 = vmatpush.msra.mxu0 %v418
  %724 = vmatpush.msra.mxu0 %v417
  %725 = vmatpush.msra.mxu0 %v416
  %726 = vmatpush.msra.mxu0 %v415
  %727 = vmatpush.msra.mxu0 %v414
  %728 = vmatpush.msra.mxu0 %v413
  %729 = vmatpush.msra.mxu0 %v412
  %730 = vmatpush.msra.mxu0 %v411
  %731 = vmatmul.f32.gmra.mxu0 %v224
  %v732 = vpop.f32.mrf.mxu0
  %v733 = vadd.f32 %v713, %v732
  %734 = vdwg.mxu0
  %735 = vmatpush.msra.mxu0 %v442
  %736 = vmatpush.msra.mxu0 %v441
  %737 = vmatpush.msra.mxu0 %v440
  %738 = vmatpush.msra.mxu0 %v439
  %739 = vmatpush.msra.mxu0 %v438
  %740 = vmatpush.msra.mxu0 %v437
  %741 = vmatpush.msra.mxu0 %v436
  %742 = vmatpush.msra.mxu0 %v435
  %743 = vmatpush.msra.mxu0 %v434
  %744 = vmatpush.msra.mxu0 %v433
  %745 = vmatpush.msra.mxu0 %v432
  %746 = vmatpush.msra.mxu0 %v431
  %747 = vmatpush.msra.mxu0 %v430
  %748 = vmatpush.msra.mxu0 %v429
  %749 = vmatpush.msra.mxu0 %v428
  %750 = vmatpush.msra.mxu0 %v427
  %751 = vmatmul.f32.gmra.mxu0 %v227
  %v752 = vpop.f32.mrf.mxu0
  %v753 = vadd.f32 %v733, %v752
  %754 = vdwg.mxu0
  %755 = vmatpush.msra.mxu0 %v458
  %756 = vmatpush.msra.mxu0 %v457
  %757 = vmatpush.msra.mxu0 %v456
  %758 = vmatpush.msra.mxu0 %v455
  %759 = vmatpush.msra.mxu0 %v454
  %760 = vmatpush.msra.mxu0 %v453
  %761 = vmatpush.msra.mxu0 %v452
  %762 = vmatpush.msra.mxu0 %v451
  %763 = vmatpush.msra.mxu0 %v450
  %764 = vmatpush.msra.mxu0 %v449
  %765 = vmatpush.msra.mxu0 %v448
  %766 = vmatpush.msra.mxu0 %v447
  %767 = vmatpush.msra.mxu0 %v446
  %768 = vmatpush.msra.mxu0 %v445
  %769 = vmatpush.msra.mxu0 %v444
  %770 = vmatpush.msra.mxu0 %v443
  %771 = vmatmul.f32.gmra.mxu0 %v228
  %v772 = vpop.f32.mrf.mxu0
  %v773 = vadd.f32 %v753, %v772
  %774 = vdwg.mxu0
  %775 = vmatpush.msra.mxu0 %v474
  %776 = vmatpush.msra.mxu0 %v473
  %777 = vmatpush.msra.mxu0 %v472
  %778 = vmatpush.msra.mxu0 %v471
  %779 = vmatpush.msra.mxu0 %v470
  %780 = vmatpush.msra.mxu0 %v469
  %781 = vmatpush.msra.mxu0 %v468
  %782 = vmatpush.msra.mxu0 %v467
  %783 = vmatpush.msra.mxu0 %v466
  %784 = vmatpush.msra.mxu0 %v465
  %785 = vmatpush.msra.mxu0 %v464
  %786 = vmatpush.msra.mxu0 %v463
  %787 = vmatpush.msra.mxu0 %v462
  %788 = vmatpush.msra.mxu0 %v461
  %789 = vmatpush.msra.mxu0 %v460
  %790 = vmatpush.msra.mxu0 %v459
  %791 = vmatmul.f32.gmra.mxu0 %v231
  %v792 = vpop.f32.mrf.mxu0
  %v793 = vadd.f32 %v773, %v792
  %794 = vdwg.mxu0
  %795 = vmatpush.msra.mxu0 %v490
  %796 = vmatpush.msra.mxu0 %v489
  %797 = vmatpush.msra.mxu0 %v488
  %798 = vmatpush.msra.mxu0 %v487
  %799 = vmatpush.msra.mxu0 %v486
  %800 = vmatpush.msra.mxu0 %v485
  %801 = vmatpush.msra.mxu0 %v484
  %802 = vmatpush.msra.mxu0 %v483
  %803 = vmatpush.msra.mxu0 %v482
  %804 = vmatpush.msra.mxu0 %v481
  %805 = vmatpush.msra.mxu0 %v480
  %806 = vmatpush.msra.mxu0 %v479
  %807 = vmatpush.msra.mxu0 %v478
  %808 = vmatpush.msra.mxu0 %v477
  %809 = vmatpush.msra.mxu0 %v476
  %810 = vmatpush.msra.mxu0 %v475
  %811 = vmatmul.f32.gmra.mxu0 %v232
  %v812 = vpop.f32.mrf.mxu0
  %v813 = vadd.f32 %v793, %v812
  %814 = vdwg.mxu0
  %v815 = vmul.f32 %v813, 0.5
  %v816 = vmul.f32 %v815, 1.442695
  %v817 = vpow.pop %v816
  %v818 = vld [vmem:[%s6] sm:$0x3]
  %820 = vrot.lane.b32.xlu0 %v818, 32
  %v821 = vpop.permute.xlu0 %820
  %v823 = vmul.f32 %v817, %v821
  %825 = vrot.lane.b32.xlu0 %v823, 96
  %v826 = vpop.permute.xlu0 %825
  %v828 = vadd.f32 %v813, %v826
  %vm829 = vcmp.lt.s32.totalorder %v53, 32
  %v830 = vsel %vm829, %v813, %v817
  %vm831 = vcmask 517120
  %832 = vst.msk [vmem:[%s12] sm:$0x3] %vm831, %v830
  %v833 = vld [vmem:[%s7] sm:$0xff]
  %v834 = vld [vmem:[%s7 + $0x8] sm:$0xff]
  %v835 = vld [vmem:[%s7 + $0x10] sm:$0xff]
  %v836 = vld [vmem:[%s7 + $0x18] sm:$0xff]
  %v837 = vld [vmem:[%s7 + $0x20] sm:$0xff]
  %v838 = vld [vmem:[%s7 + $0x28] sm:$0xff]
  %v839 = vld [vmem:[%s7 + $0x30] sm:$0xff]
  %v840 = vld [vmem:[%s7 + $0x38] sm:$0xff]
  %v841 = vld [vmem:[%s7 + $0x40] sm:$0xff]
  %v842 = vld [vmem:[%s7 + $0x48] sm:$0xff]
  %v843 = vld [vmem:[%s7 + $0x50] sm:$0xff]
  %v844 = vld [vmem:[%s7 + $0x58] sm:$0xff]
  %v845 = vld [vmem:[%s7 + $0x60] sm:$0xff]
  %v846 = vld [vmem:[%s7 + $0x68] sm:$0xff]
  %v847 = vld [vmem:[%s7 + $0x70] sm:$0xff]
  %v848 = vld [vmem:[%s7 + $0x78] sm:$0xff]
  %v849 = vld [vmem:[%s7 + $0x80] sm:$0xff]
  %v850 = vld [vmem:[%s7 + $0x88] sm:$0xff]
  %v851 = vld [vmem:[%s7 + $0x90] sm:$0xff]
  %v852 = vld [vmem:[%s7 + $0x98] sm:$0xff]
  %v853 = vld [vmem:[%s7 + $0xa0] sm:$0xff]
  %v854 = vld [vmem:[%s7 + $0xa8] sm:$0xff]
  %v855 = vld [vmem:[%s7 + $0xb0] sm:$0xff]
  %v856 = vld [vmem:[%s7 + $0xb8] sm:$0xff]
  %v857 = vld [vmem:[%s7 + $0xc0] sm:$0xff]
  %v858 = vld [vmem:[%s7 + $0xc8] sm:$0xff]
  %v859 = vld [vmem:[%s7 + $0xd0] sm:$0xff]
  %v860 = vld [vmem:[%s7 + $0xd8] sm:$0xff]
  %v861 = vld [vmem:[%s7 + $0xe0] sm:$0xff]
  %v862 = vld [vmem:[%s7 + $0xe8] sm:$0xff]
  %v863 = vld [vmem:[%s7 + $0xf0] sm:$0xff]
  %v864 = vld [vmem:[%s7 + $0xf8] sm:$0xff]
  %v865 = vld [vmem:[%s7 + $0x100] sm:$0xff]
  %v866 = vld [vmem:[%s7 + $0x108] sm:$0xff]
  %v867 = vld [vmem:[%s7 + $0x110] sm:$0xff]
  %v868 = vld [vmem:[%s7 + $0x118] sm:$0xff]
  %v869 = vld [vmem:[%s7 + $0x120] sm:$0xff]
  %v870 = vld [vmem:[%s7 + $0x128] sm:$0xff]
  %v871 = vld [vmem:[%s7 + $0x130] sm:$0xff]
  %v872 = vld [vmem:[%s7 + $0x138] sm:$0xff]
  %v873 = vld [vmem:[%s7 + $0x140] sm:$0xff]
  %v874 = vld [vmem:[%s7 + $0x148] sm:$0xff]
  %v875 = vld [vmem:[%s7 + $0x150] sm:$0xff]
  %v876 = vld [vmem:[%s7 + $0x158] sm:$0xff]
  %v877 = vld [vmem:[%s7 + $0x160] sm:$0xff]
  %v878 = vld [vmem:[%s7 + $0x168] sm:$0xff]
  %v879 = vld [vmem:[%s7 + $0x170] sm:$0xff]
  %v880 = vld [vmem:[%s7 + $0x178] sm:$0xff]
  %v881 = vld [vmem:[%s7 + $0x180] sm:$0xff]
  %v882 = vld [vmem:[%s7 + $0x188] sm:$0xff]
  %v883 = vld [vmem:[%s7 + $0x190] sm:$0xff]
  %v884 = vld [vmem:[%s7 + $0x198] sm:$0xff]
  %v885 = vld [vmem:[%s7 + $0x1a0] sm:$0xff]
  %v886 = vld [vmem:[%s7 + $0x1a8] sm:$0xff]
  %v887 = vld [vmem:[%s7 + $0x1b0] sm:$0xff]
  %v888 = vld [vmem:[%s7 + $0x1b8] sm:$0xff]
  %v889 = vld [vmem:[%s7 + $0x1c0] sm:$0xff]
  %v890 = vld [vmem:[%s7 + $0x1c8] sm:$0xff]
  %v891 = vld [vmem:[%s7 + $0x1d0] sm:$0xff]
  %v892 = vld [vmem:[%s7 + $0x1d8] sm:$0xff]
  %v893 = vld [vmem:[%s7 + $0x1e0] sm:$0xff]
  %v894 = vld [vmem:[%s7 + $0x1e8] sm:$0xff]
  %v895 = vld [vmem:[%s7 + $0x1f0] sm:$0xff]
  %v896 = vld [vmem:[%s7 + $0x1f8] sm:$0xff]
  %v897 = vld [vmem:[%s8] sm:$0xff]
  %v898 = vld [vmem:[%s8 + $0x8] sm:$0xff]
  %v901 = vperm.slane %v897, 0
  %v902 = vperm.slane %v897, 1
  %v903 = vperm.slane %v897, 2
  %v904 = vperm.slane %v897, 3
  %v905 = vperm.slane %v897, 4
  %v906 = vperm.slane %v897, 5
  %v907 = vperm.slane %v897, 6
  %v908 = vperm.slane %v897, 7
  %v909 = vperm.slane %v898, 0
  %v910 = vperm.slane %v898, 1
  %v911 = vperm.slane %v898, 2
  %v912 = vperm.slane %v898, 3
  %v913 = vperm.slane %v898, 4
  %v914 = vperm.slane %v898, 5
  %v915 = vperm.slane %v898, 6
  %v916 = vperm.slane %v898, 7
  %vm933 = vcmask 261120
  %v935 = vsel %vm933, %v828, 0
  %937 = vmatpush.msra.mxu0 0.0
  %938 = vmatpush.msra.mxu0 0.0
  %939 = vmatpush.msra.mxu0 0.0
  %940 = vmatpush.msra.mxu0 0.0
  %941 = vmatpush.msra.mxu0 0.0
  %942 = vmatpush.msra.mxu0 0.0
  %943 = vmatpush.msra.mxu0 0.0
  %944 = vmatpush.msra.mxu0 0.0
  %945 = vmatpush.msra.mxu0 0.0
  %946 = vmatpush.msra.mxu0 0.0
  %947 = vmatpush.msra.mxu0 0.0
  %948 = vmatpush.msra.mxu0 0.0
  %949 = vmatpush.msra.mxu0 %v881
  %950 = vmatpush.msra.mxu0 %v865
  %951 = vmatpush.msra.mxu0 %v849
  %952 = vmatpush.msra.mxu0 %v833
  %953 = vmatmul.f32.gmra.mxu0 %v935
  %v954 = vpop.f32.mrf.mxu0
  %v955 = vadd.f32 %v901, %v954
  %956 = vdwg.mxu0
  %957 = vmatpush.msra.mxu0 0.0
  %958 = vmatpush.msra.mxu0 0.0
  %959 = vmatpush.msra.mxu0 0.0
  %960 = vmatpush.msra.mxu0 0.0
  %961 = vmatpush.msra.mxu0 0.0
  %962 = vmatpush.msra.mxu0 0.0
  %963 = vmatpush.msra.mxu0 0.0
  %964 = vmatpush.msra.mxu0 0.0
  %965 = vmatpush.msra.mxu0 0.0
  %966 = vmatpush.msra.mxu0 0.0
  %967 = vmatpush.msra.mxu0 0.0
  %968 = vmatpush.msra.mxu0 0.0
  %969 = vmatpush.msra.mxu0 %v882
  %970 = vmatpush.msra.mxu0 %v866
  %971 = vmatpush.msra.mxu0 %v850
  %972 = vmatpush.msra.mxu0 %v834
  %973 = vmatmul.f32.gmra.mxu0 %v935
  %v974 = vpop.f32.mrf.mxu0
  %v975 = vadd.f32 %v902, %v974
  %976 = vdwg.mxu0
  %977 = vmatpush.msra.mxu0 0.0
  %978 = vmatpush.msra.mxu0 0.0
  %979 = vmatpush.msra.mxu0 0.0
  %980 = vmatpush.msra.mxu0 0.0
  %981 = vmatpush.msra.mxu0 0.0
  %982 = vmatpush.msra.mxu0 0.0
  %983 = vmatpush.msra.mxu0 0.0
  %984 = vmatpush.msra.mxu0 0.0
  %985 = vmatpush.msra.mxu0 0.0
  %986 = vmatpush.msra.mxu0 0.0
  %987 = vmatpush.msra.mxu0 0.0
  %988 = vmatpush.msra.mxu0 0.0
  %989 = vmatpush.msra.mxu0 %v883
  %990 = vmatpush.msra.mxu0 %v867
  %991 = vmatpush.msra.mxu0 %v851
  %992 = vmatpush.msra.mxu0 %v835
  %993 = vmatmul.f32.gmra.mxu0 %v935
  %v994 = vpop.f32.mrf.mxu0
  %v995 = vadd.f32 %v903, %v994
  %996 = vdwg.mxu0
  %997 = vmatpush.msra.mxu0 0.0
  %998 = vmatpush.msra.mxu0 0.0
  %999 = vmatpush.msra.mxu0 0.0
  %1000 = vmatpush.msra.mxu0 0.0
  %1001 = vmatpush.msra.mxu0 0.0
  %1002 = vmatpush.msra.mxu0 0.0
  %1003 = vmatpush.msra.mxu0 0.0
  %1004 = vmatpush.msra.mxu0 0.0
  %1005 = vmatpush.msra.mxu0 0.0
  %1006 = vmatpush.msra.mxu0 0.0
  %1007 = vmatpush.msra.mxu0 0.0
  %1008 = vmatpush.msra.mxu0 0.0
  %1009 = vmatpush.msra.mxu0 %v884
  %1010 = vmatpush.msra.mxu0 %v868
  %1011 = vmatpush.msra.mxu0 %v852
  %1012 = vmatpush.msra.mxu0 %v836
  %1013 = vmatmul.f32.gmra.mxu0 %v935
  %v1014 = vpop.f32.mrf.mxu0
  %v1015 = vadd.f32 %v904, %v1014
  %1016 = vdwg.mxu0
  %1017 = vmatpush.msra.mxu0 0.0
  %1018 = vmatpush.msra.mxu0 0.0
  %1019 = vmatpush.msra.mxu0 0.0
  %1020 = vmatpush.msra.mxu0 0.0
  %1021 = vmatpush.msra.mxu0 0.0
  %1022 = vmatpush.msra.mxu0 0.0
  %1023 = vmatpush.msra.mxu0 0.0
  %1024 = vmatpush.msra.mxu0 0.0
  %1025 = vmatpush.msra.mxu0 0.0
  %1026 = vmatpush.msra.mxu0 0.0
  %1027 = vmatpush.msra.mxu0 0.0
  %1028 = vmatpush.msra.mxu0 0.0
  %1029 = vmatpush.msra.mxu0 %v885
  %1030 = vmatpush.msra.mxu0 %v869
  %1031 = vmatpush.msra.mxu0 %v853
  %1032 = vmatpush.msra.mxu0 %v837
  %1033 = vmatmul.f32.gmra.mxu0 %v935
  %v1034 = vpop.f32.mrf.mxu0
  %v1035 = vadd.f32 %v905, %v1034
  %1036 = vdwg.mxu0
  %1037 = vmatpush.msra.mxu0 0.0
  %1038 = vmatpush.msra.mxu0 0.0
  %1039 = vmatpush.msra.mxu0 0.0
  %1040 = vmatpush.msra.mxu0 0.0
  %1041 = vmatpush.msra.mxu0 0.0
  %1042 = vmatpush.msra.mxu0 0.0
  %1043 = vmatpush.msra.mxu0 0.0
  %1044 = vmatpush.msra.mxu0 0.0
  %1045 = vmatpush.msra.mxu0 0.0
  %1046 = vmatpush.msra.mxu0 0.0
  %1047 = vmatpush.msra.mxu0 0.0
  %1048 = vmatpush.msra.mxu0 0.0
  %1049 = vmatpush.msra.mxu0 %v886
  %1050 = vmatpush.msra.mxu0 %v870
  %1051 = vmatpush.msra.mxu0 %v854
  %1052 = vmatpush.msra.mxu0 %v838
  %1053 = vmatmul.f32.gmra.mxu0 %v935
  %v1054 = vpop.f32.mrf.mxu0
  %v1055 = vadd.f32 %v906, %v1054
  %1056 = vdwg.mxu0
  %1057 = vmatpush.msra.mxu0 0.0
  %1058 = vmatpush.msra.mxu0 0.0
  %1059 = vmatpush.msra.mxu0 0.0
  %1060 = vmatpush.msra.mxu0 0.0
  %1061 = vmatpush.msra.mxu0 0.0
  %1062 = vmatpush.msra.mxu0 0.0
  %1063 = vmatpush.msra.mxu0 0.0
  %1064 = vmatpush.msra.mxu0 0.0
  %1065 = vmatpush.msra.mxu0 0.0
  %1066 = vmatpush.msra.mxu0 0.0
  %1067 = vmatpush.msra.mxu0 0.0
  %1068 = vmatpush.msra.mxu0 0.0
  %1069 = vmatpush.msra.mxu0 %v887
  %1070 = vmatpush.msra.mxu0 %v871
  %1071 = vmatpush.msra.mxu0 %v855
  %1072 = vmatpush.msra.mxu0 %v839
  %1073 = vmatmul.f32.gmra.mxu0 %v935
  %v1074 = vpop.f32.mrf.mxu0
  %v1075 = vadd.f32 %v907, %v1074
  %1076 = vdwg.mxu0
  %1077 = vmatpush.msra.mxu0 0.0
  %1078 = vmatpush.msra.mxu0 0.0
  %1079 = vmatpush.msra.mxu0 0.0
  %1080 = vmatpush.msra.mxu0 0.0
  %1081 = vmatpush.msra.mxu0 0.0
  %1082 = vmatpush.msra.mxu0 0.0
  %1083 = vmatpush.msra.mxu0 0.0
  %1084 = vmatpush.msra.mxu0 0.0
  %1085 = vmatpush.msra.mxu0 0.0
  %1086 = vmatpush.msra.mxu0 0.0
  %1087 = vmatpush.msra.mxu0 0.0
  %1088 = vmatpush.msra.mxu0 0.0
  %1089 = vmatpush.msra.mxu0 %v888
  %1090 = vmatpush.msra.mxu0 %v872
  %1091 = vmatpush.msra.mxu0 %v856
  %1092 = vmatpush.msra.mxu0 %v840
  %1093 = vmatmul.f32.gmra.mxu0 %v935
  %v1094 = vpop.f32.mrf.mxu0
  %v1095 = vadd.f32 %v908, %v1094
  %1096 = vdwg.mxu0
  %1097 = vmatpush.msra.mxu0 0.0
  %1098 = vmatpush.msra.mxu0 0.0
  %1099 = vmatpush.msra.mxu0 0.0
  %1100 = vmatpush.msra.mxu0 0.0
  %1101 = vmatpush.msra.mxu0 0.0
  %1102 = vmatpush.msra.mxu0 0.0
  %1103 = vmatpush.msra.mxu0 0.0
  %1104 = vmatpush.msra.mxu0 0.0
  %1105 = vmatpush.msra.mxu0 0.0
  %1106 = vmatpush.msra.mxu0 0.0
  %1107 = vmatpush.msra.mxu0 0.0
  %1108 = vmatpush.msra.mxu0 0.0
  %1109 = vmatpush.msra.mxu0 %v889
  %1110 = vmatpush.msra.mxu0 %v873
  %1111 = vmatpush.msra.mxu0 %v857
  %1112 = vmatpush.msra.mxu0 %v841
  %1113 = vmatmul.f32.gmra.mxu0 %v935
  %v1114 = vpop.f32.mrf.mxu0
  %v1115 = vadd.f32 %v909, %v1114
  %1116 = vdwg.mxu0
  %1117 = vmatpush.msra.mxu0 0.0
  %1118 = vmatpush.msra.mxu0 0.0
  %1119 = vmatpush.msra.mxu0 0.0
  %1120 = vmatpush.msra.mxu0 0.0
  %1121 = vmatpush.msra.mxu0 0.0
  %1122 = vmatpush.msra.mxu0 0.0
  %1123 = vmatpush.msra.mxu0 0.0
  %1124 = vmatpush.msra.mxu0 0.0
  %1125 = vmatpush.msra.mxu0 0.0
  %1126 = vmatpush.msra.mxu0 0.0
  %1127 = vmatpush.msra.mxu0 0.0
  %1128 = vmatpush.msra.mxu0 0.0
  %1129 = vmatpush.msra.mxu0 %v890
  %1130 = vmatpush.msra.mxu0 %v874
  %1131 = vmatpush.msra.mxu0 %v858
  %1132 = vmatpush.msra.mxu0 %v842
  %1133 = vmatmul.f32.gmra.mxu0 %v935
  %v1134 = vpop.f32.mrf.mxu0
  %v1135 = vadd.f32 %v910, %v1134
  %1136 = vdwg.mxu0
  %1137 = vmatpush.msra.mxu0 0.0
  %1138 = vmatpush.msra.mxu0 0.0
  %1139 = vmatpush.msra.mxu0 0.0
  %1140 = vmatpush.msra.mxu0 0.0
  %1141 = vmatpush.msra.mxu0 0.0
  %1142 = vmatpush.msra.mxu0 0.0
  %1143 = vmatpush.msra.mxu0 0.0
  %1144 = vmatpush.msra.mxu0 0.0
  %1145 = vmatpush.msra.mxu0 0.0
  %1146 = vmatpush.msra.mxu0 0.0
  %1147 = vmatpush.msra.mxu0 0.0
  %1148 = vmatpush.msra.mxu0 0.0
  %1149 = vmatpush.msra.mxu0 %v891
  %1150 = vmatpush.msra.mxu0 %v875
  %1151 = vmatpush.msra.mxu0 %v859
  %1152 = vmatpush.msra.mxu0 %v843
  %1153 = vmatmul.f32.gmra.mxu0 %v935
  %v1154 = vpop.f32.mrf.mxu0
  %v1155 = vadd.f32 %v911, %v1154
  %1156 = vdwg.mxu0
  %1157 = vmatpush.msra.mxu0 0.0
  %1158 = vmatpush.msra.mxu0 0.0
  %1159 = vmatpush.msra.mxu0 0.0
  %1160 = vmatpush.msra.mxu0 0.0
  %1161 = vmatpush.msra.mxu0 0.0
  %1162 = vmatpush.msra.mxu0 0.0
  %1163 = vmatpush.msra.mxu0 0.0
  %1164 = vmatpush.msra.mxu0 0.0
  %1165 = vmatpush.msra.mxu0 0.0
  %1166 = vmatpush.msra.mxu0 0.0
  %1167 = vmatpush.msra.mxu0 0.0
  %1168 = vmatpush.msra.mxu0 0.0
  %1169 = vmatpush.msra.mxu0 %v892
  %1170 = vmatpush.msra.mxu0 %v876
  %1171 = vmatpush.msra.mxu0 %v860
  %1172 = vmatpush.msra.mxu0 %v844
  %1173 = vmatmul.f32.gmra.mxu0 %v935
  %v1174 = vpop.f32.mrf.mxu0
  %v1175 = vadd.f32 %v912, %v1174
  %1176 = vdwg.mxu0
  %1177 = vmatpush.msra.mxu0 0.0
  %1178 = vmatpush.msra.mxu0 0.0
  %1179 = vmatpush.msra.mxu0 0.0
  %1180 = vmatpush.msra.mxu0 0.0
  %1181 = vmatpush.msra.mxu0 0.0
  %1182 = vmatpush.msra.mxu0 0.0
  %1183 = vmatpush.msra.mxu0 0.0
  %1184 = vmatpush.msra.mxu0 0.0
  %1185 = vmatpush.msra.mxu0 0.0
  %1186 = vmatpush.msra.mxu0 0.0
  %1187 = vmatpush.msra.mxu0 0.0
  %1188 = vmatpush.msra.mxu0 0.0
  %1189 = vmatpush.msra.mxu0 %v893
  %1190 = vmatpush.msra.mxu0 %v877
  %1191 = vmatpush.msra.mxu0 %v861
  %1192 = vmatpush.msra.mxu0 %v845
  %1193 = vmatmul.f32.gmra.mxu0 %v935
  %v1194 = vpop.f32.mrf.mxu0
  %v1195 = vadd.f32 %v913, %v1194
  %1196 = vdwg.mxu0
  %1197 = vmatpush.msra.mxu0 0.0
  %1198 = vmatpush.msra.mxu0 0.0
  %1199 = vmatpush.msra.mxu0 0.0
  %1200 = vmatpush.msra.mxu0 0.0
  %1201 = vmatpush.msra.mxu0 0.0
  %1202 = vmatpush.msra.mxu0 0.0
  %1203 = vmatpush.msra.mxu0 0.0
  %1204 = vmatpush.msra.mxu0 0.0
  %1205 = vmatpush.msra.mxu0 0.0
  %1206 = vmatpush.msra.mxu0 0.0
  %1207 = vmatpush.msra.mxu0 0.0
  %1208 = vmatpush.msra.mxu0 0.0
  %1209 = vmatpush.msra.mxu0 %v894
  %1210 = vmatpush.msra.mxu0 %v878
  %1211 = vmatpush.msra.mxu0 %v862
  %1212 = vmatpush.msra.mxu0 %v846
  %1213 = vmatmul.f32.gmra.mxu0 %v935
  %v1214 = vpop.f32.mrf.mxu0
  %v1215 = vadd.f32 %v914, %v1214
  %1216 = vdwg.mxu0
  %1217 = vmatpush.msra.mxu0 0.0
  %1218 = vmatpush.msra.mxu0 0.0
  %1219 = vmatpush.msra.mxu0 0.0
  %1220 = vmatpush.msra.mxu0 0.0
  %1221 = vmatpush.msra.mxu0 0.0
  %1222 = vmatpush.msra.mxu0 0.0
  %1223 = vmatpush.msra.mxu0 0.0
  %1224 = vmatpush.msra.mxu0 0.0
  %1225 = vmatpush.msra.mxu0 0.0
  %1226 = vmatpush.msra.mxu0 0.0
  %1227 = vmatpush.msra.mxu0 0.0
  %1228 = vmatpush.msra.mxu0 0.0
  %1229 = vmatpush.msra.mxu0 %v895
  %1230 = vmatpush.msra.mxu0 %v879
  %1231 = vmatpush.msra.mxu0 %v863
  %1232 = vmatpush.msra.mxu0 %v847
  %1233 = vmatmul.f32.gmra.mxu0 %v935
  %v1234 = vpop.f32.mrf.mxu0
  %v1235 = vadd.f32 %v915, %v1234
  %1236 = vdwg.mxu0
  %1237 = vmatpush.msra.mxu0 0.0
  %1238 = vmatpush.msra.mxu0 0.0
  %1239 = vmatpush.msra.mxu0 0.0
  %1240 = vmatpush.msra.mxu0 0.0
  %1241 = vmatpush.msra.mxu0 0.0
  %1242 = vmatpush.msra.mxu0 0.0
  %1243 = vmatpush.msra.mxu0 0.0
  %1244 = vmatpush.msra.mxu0 0.0
  %1245 = vmatpush.msra.mxu0 0.0
  %1246 = vmatpush.msra.mxu0 0.0
  %1247 = vmatpush.msra.mxu0 0.0
  %1248 = vmatpush.msra.mxu0 0.0
  %1249 = vmatpush.msra.mxu0 %v896
  %1250 = vmatpush.msra.mxu0 %v880
  %1251 = vmatpush.msra.mxu0 %v864
  %1252 = vmatpush.msra.mxu0 %v848
  %1253 = vmatmul.f32.gmra.mxu0 %v935
  %v1254 = vpop.f32.mrf.mxu0
  %v1255 = vadd.f32 %v916, %v1254
  %1256 = vdwg.mxu0
  %v1257 = vmax.f32 %v955, 0.0
  %v1258 = vmax.f32 %v975, 0.0
  %v1259 = vmax.f32 %v995, 0.0
  %v1260 = vmax.f32 %v1015, 0.0
  %v1261 = vmax.f32 %v1035, 0.0
  %v1262 = vmax.f32 %v1055, 0.0
  %v1263 = vmax.f32 %v1075, 0.0
  %v1264 = vmax.f32 %v1095, 0.0
  %v1265 = vmax.f32 %v1115, 0.0
  %v1266 = vmax.f32 %v1135, 0.0
  %v1267 = vmax.f32 %v1155, 0.0
  %v1268 = vmax.f32 %v1175, 0.0
  %v1269 = vmax.f32 %v1195, 0.0
  %v1270 = vmax.f32 %v1215, 0.0
  %v1271 = vmax.f32 %v1235, 0.0
  %v1272 = vmax.f32 %v1255, 0.0
  %v1275 = vrot.slane %v1259, 6
  %v1276 = vrot.slane %v1260, 6
  %v1281 = vrot.slane %v1261, 4
  %v1282 = vrot.slane %v1262, 4
  %v1287 = vrot.slane %v1263, 2
  %v1288 = vrot.slane %v1264, 2
  %v1293 = vrot.slane %v1267, 6
  %v1294 = vrot.slane %v1268, 6
  %v1299 = vrot.slane %v1269, 4
  %v1300 = vrot.slane %v1270, 4
  %v1305 = vrot.slane %v1271, 2
  %v1306 = vrot.slane %v1272, 2
  %vm1309 = vcmask 1041408
  %v1310 = vsel %vm1309, %v1257, %v1275
  %v1311 = vsel %vm1309, %v1258, %v1276
  %vm1312 = vcmask 1043456
  %v1313 = vsel %vm1312, %v1310, %v1281
  %v1314 = vsel %vm1312, %v1311, %v1282
  %vm1315 = vcmask 1045504
  %v1316 = vsel %vm1315, %v1313, %v1287
  %v1317 = vsel %vm1315, %v1314, %v1288
  %v1318 = vsel %vm1309, %v1265, %v1293
  %v1319 = vsel %vm1309, %v1266, %v1294
  %v1320 = vsel %vm1312, %v1318, %v1299
  %v1321 = vsel %vm1312, %v1319, %v1300
  %v1322 = vsel %vm1315, %v1320, %v1305
  %v1323 = vsel %vm1315, %v1321, %v1306
  %v1324 = vld [vmem:[%s9] sm:$0xff]
  %v1325 = vld [vmem:[%s9 + $0x8] sm:$0xff]
  %1326 = vrot.lane.b32.xlu0 %v1316, 17
  %v1327 = vpop.permute.xlu0 %1326
  %1328 = vrot.lane.b32.xlu0 %v1322, 17
  %v1329 = vpop.permute.xlu0 %1328
  %1330 = vrot.lane.b32.xlu0 %v1317, 17
  %v1331 = vpop.permute.xlu0 %1330
  %1332 = vrot.lane.b32.xlu0 %v1323, 17
  %v1333 = vpop.permute.xlu0 %1332
  %v1334 = vsel %vm54, %v1327, %v1331
  %v1335 = vsel %vm54, %v1329, %v1333
  %v1336 = vsel %vm54, %v1331, %v1327
  %v1337 = vsel %vm54, %v1333, %v1329
  %v1338 = vmul.f32 %v1336, %v57
  %v1339 = vmul.f32 %v1334, %v58
  %v1340 = vmul.f32 %v1337, %v57
  %v1341 = vmul.f32 %v1335, %v58
  %1342 = vrot.lane.b32.xlu0 %v1316, 16
  %v1343 = vpop.permute.xlu0 %1342
  %1344 = vrot.lane.b32.xlu0 %v1322, 16
  %v1345 = vpop.permute.xlu0 %1344
  %1346 = vrot.lane.b32.xlu0 %v1317, 16
  %v1347 = vpop.permute.xlu0 %1346
  %1348 = vrot.lane.b32.xlu0 %v1323, 16
  %v1349 = vpop.permute.xlu0 %1348
  %v1350 = vsel %vm65, %v1343, %v1347
  %v1351 = vsel %vm65, %v1345, %v1349
  %v1352 = vsel %vm65, %v1347, %v1343
  %v1353 = vsel %vm65, %v1349, %v1345
  %v1354 = vmul.f32 %v1352, %v68
  %v1355 = vmul.f32 %v1350, %v69
  %v1356 = vmul.f32 %v1353, %v68
  %v1357 = vmul.f32 %v1351, %v69
  %1358 = vrot.lane.b32.xlu0 %v1316, 15
  %v1359 = vpop.permute.xlu0 %1358
  %1360 = vrot.lane.b32.xlu0 %v1322, 15
  %v1361 = vpop.permute.xlu0 %1360
  %1362 = vrot.lane.b32.xlu0 %v1317, 15
  %v1363 = vpop.permute.xlu0 %1362
  %1364 = vrot.lane.b32.xlu0 %v1323, 15
  %v1365 = vpop.permute.xlu0 %1364
  %v1366 = vsel %vm76, %v1359, %v1363
  %v1367 = vsel %vm76, %v1361, %v1365
  %v1368 = vsel %vm76, %v1363, %v1359
  %v1369 = vsel %vm76, %v1365, %v1361
  %v1370 = vmul.f32 %v1368, %v79
  %v1371 = vmul.f32 %v1366, %v80
  %v1372 = vmul.f32 %v1369, %v79
  %v1373 = vmul.f32 %v1367, %v80
  %1374 = vrot.lane.b32.xlu0 %v1316, 1
  %v1375 = vpop.permute.xlu0 %1374
  %1376 = vrot.lane.b32.xlu0 %v1322, 1
  %v1377 = vpop.permute.xlu0 %1376
  %1378 = vrot.lane.b32.xlu0 %v1317, 1
  %v1379 = vpop.permute.xlu0 %1378
  %1380 = vrot.lane.b32.xlu0 %v1323, 1
  %v1381 = vpop.permute.xlu0 %1380
  %v1382 = vsel %vm87, %v1375, %v1379
  %v1383 = vsel %vm87, %v1377, %v1381
  %v1384 = vsel %vm87, %v1379, %v1375
  %v1385 = vsel %vm87, %v1381, %v1377
  %v1386 = vmul.f32 %v1384, %v90
  %v1387 = vmul.f32 %v1382, %v91
  %v1388 = vmul.f32 %v1385, %v90
  %v1389 = vmul.f32 %v1383, %v91
  %1390 = vrot.lane.b32.xlu0 %v1316, 127
  %v1391 = vpop.permute.xlu0 %1390
  %1392 = vrot.lane.b32.xlu0 %v1322, 127
  %v1393 = vpop.permute.xlu0 %1392
  %1394 = vrot.lane.b32.xlu0 %v1317, 127
  %v1395 = vpop.permute.xlu0 %1394
  %1396 = vrot.lane.b32.xlu0 %v1323, 127
  %v1397 = vpop.permute.xlu0 %1396
  %v1398 = vsel %vm98, %v1391, %v1395
  %v1399 = vsel %vm98, %v1393, %v1397
  %v1400 = vsel %vm98, %v1395, %v1391
  %v1401 = vsel %vm98, %v1397, %v1393
  %v1402 = vmul.f32 %v1398, %v101
  %v1403 = vmul.f32 %v1400, %v102
  %v1404 = vmul.f32 %v1399, %v101
  %v1405 = vmul.f32 %v1401, %v102
  %1406 = vrot.lane.b32.xlu0 %v1316, 113
  %v1407 = vpop.permute.xlu0 %1406
  %1408 = vrot.lane.b32.xlu0 %v1322, 113
  %v1409 = vpop.permute.xlu0 %1408
  %1410 = vrot.lane.b32.xlu0 %v1317, 113
  %v1411 = vpop.permute.xlu0 %1410
  %1412 = vrot.lane.b32.xlu0 %v1323, 113
  %v1413 = vpop.permute.xlu0 %1412
  %v1414 = vsel %vm109, %v1407, %v1411
  %v1415 = vsel %vm109, %v1409, %v1413
  %v1416 = vsel %vm109, %v1411, %v1407
  %v1417 = vsel %vm109, %v1413, %v1409
  %v1418 = vmul.f32 %v1414, %v112
  %v1419 = vmul.f32 %v1416, %v113
  %v1420 = vmul.f32 %v1415, %v112
  %v1421 = vmul.f32 %v1417, %v113
  %1422 = vrot.lane.b32.xlu0 %v1316, 112
  %v1423 = vpop.permute.xlu0 %1422
  %1424 = vrot.lane.b32.xlu0 %v1322, 112
  %v1425 = vpop.permute.xlu0 %1424
  %1426 = vrot.lane.b32.xlu0 %v1317, 112
  %v1427 = vpop.permute.xlu0 %1426
  %1428 = vrot.lane.b32.xlu0 %v1323, 112
  %v1429 = vpop.permute.xlu0 %1428
  %v1430 = vsel %vm120, %v1423, %v1427
  %v1431 = vsel %vm120, %v1425, %v1429
  %v1432 = vsel %vm120, %v1427, %v1423
  %v1433 = vsel %vm120, %v1429, %v1425
  %v1434 = vmul.f32 %v1430, %v123
  %v1435 = vmul.f32 %v1432, %v124
  %v1436 = vmul.f32 %v1431, %v123
  %v1437 = vmul.f32 %v1433, %v124
  %1438 = vrot.lane.b32.xlu0 %v1316, 111
  %v1439 = vpop.permute.xlu0 %1438
  %1440 = vrot.lane.b32.xlu0 %v1322, 111
  %v1441 = vpop.permute.xlu0 %1440
  %1442 = vrot.lane.b32.xlu0 %v1317, 111
  %v1443 = vpop.permute.xlu0 %1442
  %1444 = vrot.lane.b32.xlu0 %v1323, 111
  %v1445 = vpop.permute.xlu0 %1444
  %v1446 = vsel %vm131, %v1439, %v1443
  %v1447 = vsel %vm131, %v1441, %v1445
  %v1448 = vsel %vm131, %v1443, %v1439
  %v1449 = vsel %vm131, %v1445, %v1441
  %v1450 = vmul.f32 %v1446, %v134
  %v1451 = vmul.f32 %v1448, %v135
  %v1452 = vmul.f32 %v1447, %v134
  %v1453 = vmul.f32 %v1449, %v135
  %v1454 = vld [vmem:[%s10] sm:$0xff]
  %1456 = vset.pattern.permute.xlu0 0
  %1457 = vperm.xlu0 %1456, %v1454
  %v1458 = vpop.permute.xlu0 %1457
  %vm1460 = vcmask 130048
  %v1462 = vsel %vm1460, %v1325, 0
  %1464 = vmatpush.msra.mxu0 %v1436
  %1465 = vmatpush.msra.mxu0 %v1434
  %1466 = vmatpush.msra.mxu0 %v1420
  %1467 = vmatpush.msra.mxu0 %v1418
  %1468 = vmatpush.msra.mxu0 %v1404
  %1469 = vmatpush.msra.mxu0 %v1402
  %1470 = vmatpush.msra.mxu0 %v1322
  %1471 = vmatpush.msra.mxu0 %v1316
  %1472 = vmatpush.msra.mxu0 %v1388
  %1473 = vmatpush.msra.mxu0 %v1386
  %1474 = vmatpush.msra.mxu0 %v1372
  %1475 = vmatpush.msra.mxu0 %v1370
  %1476 = vmatpush.msra.mxu0 %v1356
  %1477 = vmatpush.msra.mxu0 %v1354
  %1478 = vmatpush.msra.mxu0 %v1340
  %1479 = vmatpush.msra.mxu0 %v1338
  %1480 = vmatmul.f32.gmra.mxu0 %v1324
  %v1481 = vpop.f32.mrf.mxu0
  %v1482 = vadd.f32 %v1458, %v1481
  %1483 = vdwg.mxu0
  %1484 = vmatpush.msra.mxu0 0.0
  %1485 = vmatpush.msra.mxu0 0.0
  %1486 = vmatpush.msra.mxu0 0.0
  %1487 = vmatpush.msra.mxu0 0.0
  %1488 = vmatpush.msra.mxu0 0.0
  %1489 = vmatpush.msra.mxu0 0.0
  %1490 = vmatpush.msra.mxu0 0.0
  %1491 = vmatpush.msra.mxu0 0.0
  %1492 = vmatpush.msra.mxu0 0.0
  %1493 = vmatpush.msra.mxu0 0.0
  %1494 = vmatpush.msra.mxu0 0.0
  %1495 = vmatpush.msra.mxu0 0.0
  %1496 = vmatpush.msra.mxu0 0.0
  %1497 = vmatpush.msra.mxu0 0.0
  %1498 = vmatpush.msra.mxu0 %v1452
  %1499 = vmatpush.msra.mxu0 %v1450
  %1500 = vmatmul.f32.gmra.mxu0 %v1462
  %v1501 = vpop.f32.mrf.mxu0
  %v1502 = vadd.f32 %v1482, %v1501
  %1503 = vdwg.mxu0
  %1504 = vmatpush.msra.mxu0 %v1437
  %1505 = vmatpush.msra.mxu0 %v1435
  %1506 = vmatpush.msra.mxu0 %v1421
  %1507 = vmatpush.msra.mxu0 %v1419
  %1508 = vmatpush.msra.mxu0 %v1405
  %1509 = vmatpush.msra.mxu0 %v1403
  %1510 = vmatpush.msra.mxu0 %v1323
  %1511 = vmatpush.msra.mxu0 %v1317
  %1512 = vmatpush.msra.mxu0 %v1389
  %1513 = vmatpush.msra.mxu0 %v1387
  %1514 = vmatpush.msra.mxu0 %v1373
  %1515 = vmatpush.msra.mxu0 %v1371
  %1516 = vmatpush.msra.mxu0 %v1357
  %1517 = vmatpush.msra.mxu0 %v1355
  %1518 = vmatpush.msra.mxu0 %v1341
  %1519 = vmatpush.msra.mxu0 %v1339
  %1520 = vmatmul.f32.gmra.mxu0 %v1324
  %v1521 = vpop.f32.mrf.mxu0
  %v1522 = vadd.f32 %v1458, %v1521
  %1523 = vdwg.mxu0
  %1524 = vmatpush.msra.mxu0 0.0
  %1525 = vmatpush.msra.mxu0 0.0
  %1526 = vmatpush.msra.mxu0 0.0
  %1527 = vmatpush.msra.mxu0 0.0
  %1528 = vmatpush.msra.mxu0 0.0
  %1529 = vmatpush.msra.mxu0 0.0
  %1530 = vmatpush.msra.mxu0 0.0
  %1531 = vmatpush.msra.mxu0 0.0
  %1532 = vmatpush.msra.mxu0 0.0
  %1533 = vmatpush.msra.mxu0 0.0
  %1534 = vmatpush.msra.mxu0 0.0
  %1535 = vmatpush.msra.mxu0 0.0
  %1536 = vmatpush.msra.mxu0 0.0
  %1537 = vmatpush.msra.mxu0 0.0
  %1538 = vmatpush.msra.mxu0 %v1453
  %1539 = vmatpush.msra.mxu0 %v1451
  %1540 = vmatmul.f32.gmra.mxu0 %v1462
  %v1541 = vpop.f32.mrf.mxu0
  %v1542 = vadd.f32 %v1522, %v1541
  %1543 = vdwg.mxu0
  %v1544 = vmul.f32 %v1502, 0.5
  %v1545 = vmul.f32 %v1542, 0.5
  %v1546 = vtanh.pop %v1544
  %v1547 = vtanh.pop %v1545
  %v1548 = vadd.f32 %v1546, 1.0
  %v1549 = vadd.f32 %v1547, 1.0
  %v1550 = vmul.f32 %v1548, 0.5
  %v1551 = vmul.f32 %v1549, 0.5
  %1552 = vst [vmem:[%s11] sm:$0xff] %v1550
  %1553 = vst [vmem:[%s11 + $0x8] sm:$0xff] %v1551
  // Predicated region
  $region46: #{autoencoder_forward.1} parent=0 // pred_check
    _
  $region47: #{autoencoder_forward.1} parent=0 // pred_check_branch
    %1555 = sbr.rel (0) target = $region49
  $region48: #{autoencoder_forward.1} parent=0 // pred_region
    _
  $region49: #{autoencoder_forward.1} parent=0 // pred_fallthru
    _
  // Predicated region
  $region50: #{autoencoder_forward.1} parent=0 // pred_check
    _
  $region51: #{autoencoder_forward.1} parent=0 // pred_check_branch
    %1557 = sbr.rel (0) target = $region53
  $region52: #{autoencoder_forward.1} parent=0 // pred_region
    _
  $region53: #{autoencoder_forward.1} parent=0 // pred_fallthru
    _
  // Predicated region
  $region54: #{autoencoder_forward.1} parent=0 // pred_check
    _
  $region55: #{autoencoder_forward.1} parent=0 // pred_check_branch
    %1559 = sbr.rel (0) target = $region57
  $region56: #{autoencoder_forward.1} parent=0 // pred_region
    _
  $region57: #{autoencoder_forward.1} parent=0 // pred_fallthru
    _
  // Predicated region
  $region58: #{autoencoder_forward.1} parent=0 // pred_check
    _
  $region59: #{autoencoder_forward.1} parent=0 // pred_check_branch
    %1561 = sbr.rel (0) target = $region61
  $region60: #{autoencoder_forward.1} parent=0 // pred_region
    _
  $region61: #{autoencoder_forward.1} parent=0 // pred_fallthru
    _

</llo_original>
